<compile_context>
chip_gen: v7x
topology: tpu7x:2x2x1
jax: 0.10.0
libtpu: 0.0.40
codegen_flags: <defaults>
</compile_context>

<pallas_src>
import math
import jax
import jax.numpy as jnp
from jax.experimental import pallas as pl
from jax.experimental.pallas import tpu as pltpu

# ---- small shapes consistent with the module ----
T, B, D = 8, 2, 32          # len_query, batch, d_model
H = D // 2                  # per-direction LSTM hidden (d_model // 2)
D_FF = 64                   # feed-forward inner dim
EPS = 1e-5


# ------------------------------ fused layer kernel -------------------------------
def fused_encoder_layer_kernel(x_ref, xrev_ref, ln_g_ref, ln_b_ref,
                               w_in_ref, w_hh_ref, b_ref,
                               w1_ref, b1_ref, w2_ref, b2_ref,
                               out_ref, hN_ref, cN_ref,
                               rnn_sc):
    x = x_ref[...]                                          # [T*B, D] f32 (time-major)

    # --- preprocess_rnn: LayerNorm (rowwise; commutes with the time reversal) ---
    def layer_norm(v):
        mu = jnp.mean(v, axis=-1, keepdims=True)
        vc = v - mu
        var = jnp.mean(vc * vc, axis=-1, keepdims=True)
        return vc * jax.lax.rsqrt(var + EPS) * ln_g_ref[...] + ln_b_ref[...]

    ln_x = layer_norm(x)                                    # [T*B, D]
    ln_x_rev = layer_norm(xrev_ref[...])                    # [T*B, D], time-reversed copy

    # --- hoisted input projection, both directions, already time-aligned per fused step ---
    # lnx2 row-block t = [ln_x(t) | ln_x(T-1-t)]; W_in maps the two halves to the fwd / bwd
    # gate columns of the gate-major interleaved layout.  Single bf16 MXU pass.
    lnx2 = jnp.concatenate([ln_x, ln_x_rev], axis=1).astype(jnp.bfloat16)   # [T*B, 2D]
    gates_x = jnp.dot(lnx2, w_in_ref[...],
                      preferred_element_type=jnp.float32) + b_ref[...]      # [T*B, 8H] f32

    w_hh = w_hh_ref[...]                                    # [2H, 8H] bf16, block-structured

    def sigmoid_t(v):                                       # sigmoid via tanh: no divide on chain
        return 0.5 * jnp.tanh(0.5 * v) + 0.5

    h_cat = jnp.zeros((B, 2 * H), jnp.float32)              # [h_f | h_b]
    c_cat = jnp.zeros((B, 2 * H), jnp.float32)              # [c_f | c_b]

    # Fully static unroll over T; each step = ONE [B,2H]x[2H,8H] matmul + ONE sigmoid + tanh pass
    # for BOTH directions (fwd time t, bwd time T-1-t).
    for t in range(T):
        gx = gates_x[t * B:(t + 1) * B, :]                  # [B, 8H]  (off the dependent chain)
        gates = gx + jnp.dot(h_cat.astype(jnp.bfloat16), w_hh,
                             preferred_element_type=jnp.float32)            # [B, 8H]
        s = sigmoid_t(gates[:, :6 * H])                     # i|f|o for both dirs, one EUP pass
        g = jnp.tanh(gates[:, 6 * H:])                      # g for both dirs
        c_cat = s[:, 2 * H:4 * H] * c_cat + s[:, :2 * H] * g
        h_cat = s[:, 4 * H:6 * H] * jnp.tanh(c_cat)
        # stash outputs (not on the recurrence dependence chain)
        rnn_sc[t * B:(t + 1) * B, :H] = h_cat[:, :H]        # fwd hidden -> output time t
        tb = T - 1 - t
        rnn_sc[tb * B:(tb + 1) * B, H:] = h_cat[:, H:]      # bwd hidden -> output time T-1-t

    # --- postprocess_rnn: residual add (dropout == identity at inference) ---
    x2 = x + rnn_sc[...]

    # preprocess_ffn LayerNorm: dead code in the original module (result unused) — omitted.

    # --- FFN (fc1 -> relu -> fc2) + residual (postprocess_ffn); f32, off the recurrence chain ---
    h1 = jnp.maximum(
        jnp.dot(x2, w1_ref[...], preferred_element_type=jnp.float32) + b1_ref[...], 0.0)
    y = jnp.dot(h1, w2_ref[...], preferred_element_type=jnp.float32) + b2_ref[...]
    out_ref[...] = x2 + y

    # --- final LSTM states: fused step T-1 produced the last fwd (time T-1) AND last bwd
    #     (input time 0) hidden/cell states.  Rows 0:B = forward, B:2B = backward. ---
    hN_ref[:B, :] = h_cat[:, :H]
    hN_ref[B:, :] = h_cat[:, H:]
    cN_ref[:B, :] = c_cat[:, :H]
    cN_ref[B:, :] = c_cat[:, H:]


# -------------------------- weight preparation helpers ---------------------------
def _gate_blocks(w):
    """PyTorch gate-block order (i, f, g, o) along axis 0 -> list [i, f, o, g]."""
    return [w[0:H], w[H:2 * H], w[3 * H:4 * H], w[2 * H:3 * H]]


def build_fused_lstm_weights(p):
    """Build gate-major interleaved fused weights.

    Column layout of the 8H gate axis (each block H wide):
        [ i_f i_b | f_f f_b | o_f o_b | g_f g_b ]
    W_in  [2D, 8H]: rows 0:D consume ln(x_t)       -> *_f columns
                    rows D:2D consume ln(x_{T-1-t}) -> *_b columns
    W_hh  [2H, 8H]: rows 0:H consume h_f -> *_f columns, rows H:2H consume h_b -> *_b columns
    """
    gi_f = _gate_blocks(p["w_ih_f"]); gi_b = _gate_blocks(p["w_ih_b"])     # each [H, D]
    gh_f = _gate_blocks(p["w_hh_f"]); gh_b = _gate_blocks(p["w_hh_b"])     # each [H, H]
    bf = _gate_blocks(p["b_ih_f"] + p["b_hh_f"])                           # each [H]
    bb = _gate_blocks(p["b_ih_b"] + p["b_hh_b"])

    w_in = jnp.zeros((2 * D, 8 * H), jnp.float32)
    w_hh = jnp.zeros((2 * H, 8 * H), jnp.float32)
    bias = jnp.zeros((8 * H,), jnp.float32)
    for g in range(4):
        c0 = 2 * g * H
        w_in = w_in.at[0:D, c0:c0 + H].set(gi_f[g].T)
        w_in = w_in.at[D:2 * D, c0 + H:c0 + 2 * H].set(gi_b[g].T)
        w_hh = w_hh.at[0:H, c0:c0 + H].set(gh_f[g].T)
        w_hh = w_hh.at[H:2 * H, c0 + H:c0 + 2 * H].set(gh_b[g].T)
        bias = bias.at[c0:c0 + H].set(bf[g])
        bias = bias.at[c0 + H:c0 + 2 * H].set(bb[g])
    # bf16 operands -> single-pass MXU matmuls on the recurrence chain (f32 accumulate).
    return w_in.astype(jnp.bfloat16), w_hh.astype(jnp.bfloat16), bias.reshape(1, 8 * H)


# ------------------------------- full EncoderLayer -------------------------------
def encoder_layer_forward(x_tbd, params):
    """x_tbd: [T, B, D]. Returns (packed_out [T*B, D], (h_n [2,B,H], c_n [2,B,H]))."""
    x_flat = x_tbd.reshape(T * B, D)
    x_rev_flat = x_tbd[::-1].reshape(T * B, D)          # time-reversed copy (cheap, ~2 KiB)

    w_in, w_hh, bias = build_fused_lstm_weights(params)

    full = lambda shape: pl.BlockSpec(shape, lambda i: (0, 0))

    out, hN, cN = pl.pallas_call(
        fused_encoder_layer_kernel,
        out_shape=(jax.ShapeDtypeStruct((T * B, D), jnp.float32),
                   jax.ShapeDtypeStruct((2 * B, H), jnp.float32),
                   jax.ShapeDtypeStruct((2 * B, H), jnp.float32)),
        grid=(1,),
        in_specs=[full((T * B, D)),            # x (time-major)
                  full((T * B, D)),            # x time-reversed
                  full((1, D)),                # ln1 gamma
                  full((1, D)),                # ln1 beta
                  full((2 * D, 8 * H)),        # fused input-projection weight (bf16)
                  full((2 * H, 8 * H)),        # fused recurrence weight (bf16)
                  full((1, 8 * H)),            # fused bias (f32)
                  full((D, D_FF)),             # FFN w1^T
                  full((1, D_FF)),             # FFN b1
                  full((D_FF, D)),             # FFN w2^T
                  full((1, D))],               # FFN b2
        out_specs=(full((T * B, D)),
                   full((2 * B, H)),
                   full((2 * B, H))),
        scratch_shapes=[pltpu.VMEM((T * B, D), jnp.float32)],   # rnn_out buffer
        compiler_params=pltpu.CompilerParams(dimension_semantics=("arbitrary",)),
    )(x_flat, x_rev_flat,
      params["ln1_g"].reshape(1, D), params["ln1_b"].reshape(1, D),
      w_in, w_hh, bias,
      params["w1"].T, params["b1"].reshape(1, D_FF),
      params["w2"].T, params["b2"].reshape(1, D))

    return out, (hN.reshape(2, B, H), cN.reshape(2, B, H))


encoder_layer = jax.jit(encoder_layer_forward)


# ------------------------------ pure-JAX reference -------------------------------
def reference_forward(x_tbd, params):
    x_flat = x_tbd.reshape(T * B, D)

    def ln(v, g, b):
        mu = jnp.mean(v, -1, keepdims=True)
        vc = v - mu
        var = jnp.mean(vc * vc, -1, keepdims=True)
        return vc * jax.lax.rsqrt(var + EPS) * g + b

    ln_x = ln(x_flat, params["ln1_g"], params["ln1_b"]).reshape(T, B, D)

    def run_dir(xs, w_ih, w_hh, b_ih, b_hh):
        bias = b_ih + b_hh

        def step(carry, x_t):
            h, c = carry
            gates = x_t @ w_ih.T + h @ w_hh.T + bias
            i = jax.nn.sigmoid(gates[:, :H])
            f = jax.nn.sigmoid(gates[:, H:2 * H])
            g = jnp.tanh(gates[:, 2 * H:3 * H])
            o = jax.nn.sigmoid(gates[:, 3 * H:])
            c2 = f * c + i * g
            h2 = o * jnp.tanh(c2)
            return (h2, c2), h2

        init = (jnp.zeros((B, H), jnp.float32), jnp.zeros((B, H), jnp.float32))
        (hN, cN), hs = jax.lax.scan(step, init, xs)
        return hs, hN, cN

    out_f, hN_f, cN_f = run_dir(ln_x, params["w_ih_f"], params["w_hh_f"],
                                params["b_ih_f"], params["b_hh_f"])
    out_b_rev, hN_b, cN_b = run_dir(ln_x[::-1], params["w_ih_b"], params["w_hh_b"],
                                    params["b_ih_b"], params["b_hh_b"])
    rnn_out = jnp.concatenate([out_f, out_b_rev[::-1]], axis=-1).reshape(T * B, D)
    x2 = x_flat + rnn_out
    h1 = jnp.maximum(x2 @ params["w1"].T + params["b1"], 0.0)
    out = x2 + (h1 @ params["w2"].T + params["b2"])
    return out, (jnp.stack([hN_f, hN_b]), jnp.stack([cN_f, cN_b]))


# ------------------------------------ params --------------------------------------
def init_params(key):
    ks = jax.random.split(key, 16)
    k_lstm = 1.0 / math.sqrt(H)
    u = lambda k, shape, lim: jax.random.uniform(k, shape, jnp.float32, -lim, lim)
    return {
        # LayerNorms (ln2_* belong to preprocess_ffn whose output is unused by the module)
        "ln1_g": jnp.ones((D,), jnp.float32), "ln1_b": jnp.zeros((D,), jnp.float32),
        "ln2_g": jnp.ones((D,), jnp.float32), "ln2_b": jnp.zeros((D,), jnp.float32),
        # LSTM forward direction (PyTorch shapes, gate row order i|f|g|o)
        "w_ih_f": u(ks[0], (4 * H, D), k_lstm), "w_hh_f": u(ks[1], (4 * H, H), k_lstm),
        "b_ih_f": u(ks[2], (4 * H,), k_lstm),   "b_hh_f": u(ks[3], (4 * H,), k_lstm),
        # LSTM backward direction
        "w_ih_b": u(ks[4], (4 * H, D), k_lstm), "w_hh_b": u(ks[5], (4 * H, H), k_lstm),
        "b_ih_b": u(ks[6], (4 * H,), k_lstm),   "b_hh_b": u(ks[7], (4 * H,), k_lstm),
        # FeedForward (PyTorch Linear shapes: [out, in])
        "w1": u(ks[8], (D_FF, D), 1.0 / math.sqrt(D)),
        "b1": u(ks[9], (D_FF,), 1.0 / math.sqrt(D)),
        "w2": u(ks[10], (D, D_FF), 1.0 / math.sqrt(D_FF)),
        "b2": u(ks[11], (D,), 1.0 / math.sqrt(D_FF)),
    }


if __name__ == "__main__":
    key = jax.random.PRNGKey(0)
    k_x, k_p = jax.random.split(key)
    x = jax.random.normal(k_x, (T, B, D), jnp.float32)   # packed data, time-major
    params = init_params(k_p)

    out, (h_n, c_n) = encoder_layer(x, params)
    jax.block_until_ready((out, h_n, c_n))

    ref_out, (ref_h, ref_c) = reference_forward(x, params)

    assert out.shape == (T * B, D)
    assert h_n.shape == (2, B, H) and c_n.shape == (2, B, H)
    assert bool(jnp.all(jnp.isfinite(out)))
    # Tolerance accounts for bf16 MXU operands on the recurrence/input-projection path
    # (reference is pure f32); gate math, states, residuals and FFN are f32 in the kernel.
    assert bool(jnp.allclose(out, ref_out, atol=2e-2, rtol=2e-2))
    assert bool(jnp.allclose(h_n, ref_h, atol=2e-2, rtol=2e-2))
    assert bool(jnp.allclose(c_n, ref_c, atol=2e-2, rtol=2e-2))
    print("KERNEL_OK")
</pallas_src>

<mosaic_0001>
module attributes {stable_mosaic.version = 11 : i64} {
  func.func @fused_encoder_layer_kernel(%arg0: i32, %arg1: memref<16x32xf32, #tpu.memory_space<vmem>>, %arg2: memref<16x32xf32, #tpu.memory_space<vmem>>, %arg3: memref<1x32xf32, #tpu.memory_space<vmem>>, %arg4: memref<1x32xf32, #tpu.memory_space<vmem>>, %arg5: memref<64x128xbf16, #tpu.memory_space<vmem>>, %arg6: memref<32x128xbf16, #tpu.memory_space<vmem>>, %arg7: memref<1x128xf32, #tpu.memory_space<vmem>>, %arg8: memref<32x64xf32, #tpu.memory_space<vmem>>, %arg9: memref<1x64xf32, #tpu.memory_space<vmem>>, %arg10: memref<64x32xf32, #tpu.memory_space<vmem>>, %arg11: memref<1x32xf32, #tpu.memory_space<vmem>>, %arg12: memref<16x32xf32, #tpu.memory_space<vmem>>, %arg13: memref<4x16xf32, #tpu.memory_space<vmem>>, %arg14: memref<4x16xf32, #tpu.memory_space<vmem>>, %arg15: memref<16x32xf32, #tpu.memory_space<vmem>>) attributes {dimension_semantics = [#tpu.dimension_semantics<arbitrary>], iteration_bounds = array<i64: 1>, scalar_prefetch = 0 : i64, scratch_operands = 1 : i64, tpu.core_type = #tpu.core_type<tc>, window_params = [{pipeline_mode = #tpu.pipeline_mode<synchronous>, transform_indices = @transform_0, window_bounds = array<i64: 16, 32>}, {pipeline_mode = #tpu.pipeline_mode<synchronous>, transform_indices = @transform_1, window_bounds = array<i64: 16, 32>}, {pipeline_mode = #tpu.pipeline_mode<synchronous>, transform_indices = @transform_2, window_bounds = array<i64: 1, 32>}, {pipeline_mode = #tpu.pipeline_mode<synchronous>, transform_indices = @transform_3, window_bounds = array<i64: 1, 32>}, {pipeline_mode = #tpu.pipeline_mode<synchronous>, transform_indices = @transform_4, window_bounds = array<i64: 64, 128>}, {pipeline_mode = #tpu.pipeline_mode<synchronous>, transform_indices = @transform_5, window_bounds = array<i64: 32, 128>}, {pipeline_mode = #tpu.pipeline_mode<synchronous>, transform_indices = @transform_6, window_bounds = array<i64: 1, 128>}, {pipeline_mode = #tpu.pipeline_mode<synchronous>, transform_indices = @transform_7, window_bounds = array<i64: 32, 64>}, {pipeline_mode = #tpu.pipeline_mode<synchronous>, transform_indices = @transform_8, window_bounds = array<i64: 1, 64>}, {pipeline_mode = #tpu.pipeline_mode<synchronous>, transform_indices = @transform_9, window_bounds = array<i64: 64, 32>}, {pipeline_mode = #tpu.pipeline_mode<synchronous>, transform_indices = @transform_10, window_bounds = array<i64: 1, 32>}, {pipeline_mode = #tpu.pipeline_mode<synchronous>, transform_indices = @transform_11, window_bounds = array<i64: 16, 32>}, {pipeline_mode = #tpu.pipeline_mode<synchronous>, transform_indices = @transform_12, window_bounds = array<i64: 4, 16>}, {pipeline_mode = #tpu.pipeline_mode<synchronous>, transform_indices = @transform_13, window_bounds = array<i64: 4, 16>}]} {
    %c0 = arith.constant 0 : index
    %c0_0 = arith.constant 0 : index
    %0 = vector.load %arg1[%c0, %c0_0] : memref<16x32xf32, #tpu.memory_space<vmem>>, vector<16x32xf32>
    %cst = arith.constant dense<0.000000e+00> : vector<16xf32>
    %1 = vector.multi_reduction <add>, %0, %cst [1] : vector<16x32xf32> to vector<16xf32>
    %2 = vector.shape_cast %1 : vector<16xf32> to vector<16x1xf32>
    %cst_1 = arith.constant 3.200000e+01 : f32
    %3 = vector.broadcast %cst_1 : f32 to vector<16x1xf32>
    %4 = arith.divf %2, %3 : vector<16x1xf32>
    %5 = vector.broadcast %4 : vector<16x1xf32> to vector<16x32xf32>
    %6 = arith.subf %0, %5 : vector<16x32xf32>
    %7 = arith.mulf %6, %6 : vector<16x32xf32>
    %cst_2 = arith.constant dense<0.000000e+00> : vector<16xf32>
    %8 = vector.multi_reduction <add>, %7, %cst_2 [1] : vector<16x32xf32> to vector<16xf32>
    %9 = vector.shape_cast %8 : vector<16xf32> to vector<16x1xf32>
    %cst_3 = arith.constant 3.200000e+01 : f32
    %10 = vector.broadcast %cst_3 : f32 to vector<16x1xf32>
    %11 = arith.divf %9, %10 : vector<16x1xf32>
    %cst_4 = arith.constant 9.99999974E-6 : f32
    %12 = vector.broadcast %cst_4 : f32 to vector<16x1xf32>
    %13 = arith.addf %11, %12 : vector<16x1xf32>
    %14 = math.rsqrt %13 : vector<16x1xf32>
    %15 = vector.broadcast %14 : vector<16x1xf32> to vector<16x32xf32>
    %16 = arith.mulf %6, %15 : vector<16x32xf32>
    %c0_5 = arith.constant 0 : index
    %c0_6 = arith.constant 0 : index
    %17 = vector.load %arg3[%c0_5, %c0_6] : memref<1x32xf32, #tpu.memory_space<vmem>>, vector<1x32xf32>
    %18 = vector.broadcast %17 : vector<1x32xf32> to vector<16x32xf32>
    %19 = arith.mulf %16, %18 : vector<16x32xf32>
    %c0_7 = arith.constant 0 : index
    %c0_8 = arith.constant 0 : index
    %20 = vector.load %arg4[%c0_7, %c0_8] : memref<1x32xf32, #tpu.memory_space<vmem>>, vector<1x32xf32>
    %21 = vector.broadcast %20 : vector<1x32xf32> to vector<16x32xf32>
    %22 = arith.addf %19, %21 : vector<16x32xf32>
    %c0_9 = arith.constant 0 : index
    %c0_10 = arith.constant 0 : index
    %23 = vector.load %arg2[%c0_9, %c0_10] : memref<16x32xf32, #tpu.memory_space<vmem>>, vector<16x32xf32>
    %cst_11 = arith.constant dense<0.000000e+00> : vector<16xf32>
    %24 = vector.multi_reduction <add>, %23, %cst_11 [1] : vector<16x32xf32> to vector<16xf32>
    %25 = vector.shape_cast %24 : vector<16xf32> to vector<16x1xf32>
    %cst_12 = arith.constant 3.200000e+01 : f32
    %26 = vector.broadcast %cst_12 : f32 to vector<16x1xf32>
    %27 = arith.divf %25, %26 : vector<16x1xf32>
    %28 = vector.broadcast %27 : vector<16x1xf32> to vector<16x32xf32>
    %29 = arith.subf %23, %28 : vector<16x32xf32>
    %30 = arith.mulf %29, %29 : vector<16x32xf32>
    %cst_13 = arith.constant dense<0.000000e+00> : vector<16xf32>
    %31 = vector.multi_reduction <add>, %30, %cst_13 [1] : vector<16x32xf32> to vector<16xf32>
    %32 = vector.shape_cast %31 : vector<16xf32> to vector<16x1xf32>
    %cst_14 = arith.constant 3.200000e+01 : f32
    %33 = vector.broadcast %cst_14 : f32 to vector<16x1xf32>
    %34 = arith.divf %32, %33 : vector<16x1xf32>
    %cst_15 = arith.constant 9.99999974E-6 : f32
    %35 = vector.broadcast %cst_15 : f32 to vector<16x1xf32>
    %36 = arith.addf %34, %35 : vector<16x1xf32>
    %37 = math.rsqrt %36 : vector<16x1xf32>
    %38 = vector.broadcast %37 : vector<16x1xf32> to vector<16x32xf32>
    %39 = arith.mulf %29, %38 : vector<16x32xf32>
    %c0_16 = arith.constant 0 : index
    %c0_17 = arith.constant 0 : index
    %40 = vector.load %arg3[%c0_16, %c0_17] : memref<1x32xf32, #tpu.memory_space<vmem>>, vector<1x32xf32>
    %41 = vector.broadcast %40 : vector<1x32xf32> to vector<16x32xf32>
    %42 = arith.mulf %39, %41 : vector<16x32xf32>
    %c0_18 = arith.constant 0 : index
    %c0_19 = arith.constant 0 : index
    %43 = vector.load %arg4[%c0_18, %c0_19] : memref<1x32xf32, #tpu.memory_space<vmem>>, vector<1x32xf32>
    %44 = vector.broadcast %43 : vector<1x32xf32> to vector<16x32xf32>
    %45 = arith.addf %42, %44 : vector<16x32xf32>
    %46 = tpu.concatenate %22, %45 in 1 : vector<16x32xf32>, vector<16x32xf32> -> vector<16x64xf32>
    %47 = arith.truncf %46 : vector<16x64xf32> to vector<16x64xbf16>
    %c0_20 = arith.constant 0 : index
    %c0_21 = arith.constant 0 : index
    %48 = vector.load %arg5[%c0_20, %c0_21] : memref<64x128xbf16, #tpu.memory_space<vmem>>, vector<64x128xbf16>
    %cst_22 = arith.constant dense<0.000000e+00> : vector<16x128xf32>
    %49 = tpu.matmul %47, %48, %cst_22 {dimension_numbers = #tpu.dot_dimension_numbers<[1], [0], [0], [1], [0, 0, 1, 1], [], []>} : vector<16x64xbf16>, vector<64x128xbf16>, vector<16x128xf32> -> vector<16x128xf32>
    %c0_23 = arith.constant 0 : index
    %c0_24 = arith.constant 0 : index
    %50 = vector.load %arg7[%c0_23, %c0_24] : memref<1x128xf32, #tpu.memory_space<vmem>>, vector<1x128xf32>
    %51 = vector.broadcast %50 : vector<1x128xf32> to vector<16x128xf32>
    %52 = arith.addf %49, %51 : vector<16x128xf32>
    %c0_25 = arith.constant 0 : index
    %c0_26 = arith.constant 0 : index
    %53 = vector.load %arg6[%c0_25, %c0_26] : memref<32x128xbf16, #tpu.memory_space<vmem>>, vector<32x128xbf16>
    %cst_27 = arith.constant 0.000000e+00 : f32
    %54 = vector.broadcast %cst_27 : f32 to vector<2x32xf32>
    %cst_28 = arith.constant 0.000000e+00 : f32
    %55 = vector.broadcast %cst_28 : f32 to vector<2x32xf32>
    %56 = vector.extract_strided_slice %52 {offsets = [0, 0], sizes = [2, 128], strides = [1, 1]} : vector<16x128xf32> to vector<2x128xf32>
    %57 = arith.truncf %54 : vector<2x32xf32> to vector<2x32xbf16>
    %cst_29 = arith.constant dense<0.000000e+00> : vector<2x128xf32>
    %58 = tpu.matmul %57, %53, %cst_29 {dimension_numbers = #tpu.dot_dimension_numbers<[1], [0], [0], [1], [0, 0, 1, 1], [], []>} : vector<2x32xbf16>, vector<32x128xbf16>, vector<2x128xf32> -> vector<2x128xf32>
    %59 = arith.addf %56, %58 : vector<2x128xf32>
    %60 = vector.extract_strided_slice %59 {offsets = [0, 0], sizes = [2, 96], strides = [1, 1]} : vector<2x128xf32> to vector<2x96xf32>
    %cst_30 = arith.constant 5.000000e-01 : f32
    %61 = vector.broadcast %cst_30 : f32 to vector<2x96xf32>
    %62 = arith.mulf %61, %60 : vector<2x96xf32>
    %63 = math.tanh %62 : vector<2x96xf32>
    %cst_31 = arith.constant 5.000000e-01 : f32
    %64 = vector.broadcast %cst_31 : f32 to vector<2x96xf32>
    %65 = arith.mulf %64, %63 : vector<2x96xf32>
    %cst_32 = arith.constant 5.000000e-01 : f32
    %66 = vector.broadcast %cst_32 : f32 to vector<2x96xf32>
    %67 = arith.addf %65, %66 : vector<2x96xf32>
    %68 = vector.extract_strided_slice %59 {offsets = [0, 96], sizes = [2, 32], strides = [1, 1]} : vector<2x128xf32> to vector<2x32xf32>
    %69 = math.tanh %68 : vector<2x32xf32>
    %70 = vector.extract_strided_slice %67 {offsets = [0, 32], sizes = [2, 32], strides = [1, 1]} : vector<2x96xf32> to vector<2x32xf32>
    %71 = arith.mulf %70, %55 : vector<2x32xf32>
    %72 = vector.extract_strided_slice %67 {offsets = [0, 0], sizes = [2, 32], strides = [1, 1]} : vector<2x96xf32> to vector<2x32xf32>
    %73 = arith.mulf %72, %69 : vector<2x32xf32>
    %74 = arith.addf %71, %73 : vector<2x32xf32>
    %75 = vector.extract_strided_slice %67 {offsets = [0, 64], sizes = [2, 32], strides = [1, 1]} : vector<2x96xf32> to vector<2x32xf32>
    %76 = math.tanh %74 : vector<2x32xf32>
    %77 = arith.mulf %75, %76 : vector<2x32xf32>
    %78 = vector.extract_strided_slice %77 {offsets = [0, 0], sizes = [2, 16], strides = [1, 1]} : vector<2x32xf32> to vector<2x16xf32>
    %c0_33 = arith.constant 0 : index
    %c0_34 = arith.constant 0 : index
    %79 = vector.load %arg15[%c0_33, %c0_34] : memref<16x32xf32, #tpu.memory_space<vmem>>, vector<2x16xf32>
    tpu.vector_store %arg15[%c0_33, %c0_34], %78 {strides = array<i32>} : memref<16x32xf32, #tpu.memory_space<vmem>>, vector<2x16xf32>,
    %80 = vector.extract_strided_slice %77 {offsets = [0, 16], sizes = [2, 16], strides = [1, 1]} : vector<2x32xf32> to vector<2x16xf32>
    %c14 = arith.constant 14 : index
    %c16 = arith.constant 16 : index
    %81 = vector.load %arg15[%c14, %c16] : memref<16x32xf32, #tpu.memory_space<vmem>>, vector<2x16xf32>
    tpu.vector_store %arg15[%c14, %c16], %80 {strides = array<i32>} : memref<16x32xf32, #tpu.memory_space<vmem>>, vector<2x16xf32>,
    %82 = vector.extract_strided_slice %52 {offsets = [2, 0], sizes = [2, 128], strides = [1, 1]} : vector<16x128xf32> to vector<2x128xf32>
    %83 = arith.truncf %77 : vector<2x32xf32> to vector<2x32xbf16>
    %cst_35 = arith.constant dense<0.000000e+00> : vector<2x128xf32>
    %84 = tpu.matmul %83, %53, %cst_35 {dimension_numbers = #tpu.dot_dimension_numbers<[1], [0], [0], [1], [0, 0, 1, 1], [], []>} : vector<2x32xbf16>, vector<32x128xbf16>, vector<2x128xf32> -> vector<2x128xf32>
    %85 = arith.addf %82, %84 : vector<2x128xf32>
    %86 = vector.extract_strided_slice %85 {offsets = [0, 0], sizes = [2, 96], strides = [1, 1]} : vector<2x128xf32> to vector<2x96xf32>
    %cst_36 = arith.constant 5.000000e-01 : f32
    %87 = vector.broadcast %cst_36 : f32 to vector<2x96xf32>
    %88 = arith.mulf %87, %86 : vector<2x96xf32>
    %89 = math.tanh %88 : vector<2x96xf32>
    %cst_37 = arith.constant 5.000000e-01 : f32
    %90 = vector.broadcast %cst_37 : f32 to vector<2x96xf32>
    %91 = arith.mulf %90, %89 : vector<2x96xf32>
    %cst_38 = arith.constant 5.000000e-01 : f32
    %92 = vector.broadcast %cst_38 : f32 to vector<2x96xf32>
    %93 = arith.addf %91, %92 : vector<2x96xf32>
    %94 = vector.extract_strided_slice %85 {offsets = [0, 96], sizes = [2, 32], strides = [1, 1]} : vector<2x128xf32> to vector<2x32xf32>
    %95 = math.tanh %94 : vector<2x32xf32>
    %96 = vector.extract_strided_slice %93 {offsets = [0, 32], sizes = [2, 32], strides = [1, 1]} : vector<2x96xf32> to vector<2x32xf32>
    %97 = arith.mulf %96, %74 : vector<2x32xf32>
    %98 = vector.extract_strided_slice %93 {offsets = [0, 0], sizes = [2, 32], strides = [1, 1]} : vector<2x96xf32> to vector<2x32xf32>
    %99 = arith.mulf %98, %95 : vector<2x32xf32>
    %100 = arith.addf %97, %99 : vector<2x32xf32>
    %101 = vector.extract_strided_slice %93 {offsets = [0, 64], sizes = [2, 32], strides = [1, 1]} : vector<2x96xf32> to vector<2x32xf32>
    %102 = math.tanh %100 : vector<2x32xf32>
    %103 = arith.mulf %101, %102 : vector<2x32xf32>
    %104 = vector.extract_strided_slice %103 {offsets = [0, 0], sizes = [2, 16], strides = [1, 1]} : vector<2x32xf32> to vector<2x16xf32>
    %c2 = arith.constant 2 : index
    %c0_39 = arith.constant 0 : index
    %105 = vector.load %arg15[%c2, %c0_39] : memref<16x32xf32, #tpu.memory_space<vmem>>, vector<2x16xf32>
    tpu.vector_store %arg15[%c2, %c0_39], %104 {strides = array<i32>} : memref<16x32xf32, #tpu.memory_space<vmem>>, vector<2x16xf32>,
    %106 = vector.extract_strided_slice %103 {offsets = [0, 16], sizes = [2, 16], strides = [1, 1]} : vector<2x32xf32> to vector<2x16xf32>
    %c12 = arith.constant 12 : index
    %c16_40 = arith.constant 16 : index
    %107 = vector.load %arg15[%c12, %c16_40] : memref<16x32xf32, #tpu.memory_space<vmem>>, vector<2x16xf32>
    tpu.vector_store %arg15[%c12, %c16_40], %106 {strides = array<i32>} : memref<16x32xf32, #tpu.memory_space<vmem>>, vector<2x16xf32>,
    %108 = vector.extract_strided_slice %52 {offsets = [4, 0], sizes = [2, 128], strides = [1, 1]} : vector<16x128xf32> to vector<2x128xf32>
    %109 = arith.truncf %103 : vector<2x32xf32> to vector<2x32xbf16>
    %cst_41 = arith.constant dense<0.000000e+00> : vector<2x128xf32>
    %110 = tpu.matmul %109, %53, %cst_41 {dimension_numbers = #tpu.dot_dimension_numbers<[1], [0], [0], [1], [0, 0, 1, 1], [], []>} : vector<2x32xbf16>, vector<32x128xbf16>, vector<2x128xf32> -> vector<2x128xf32>
    %111 = arith.addf %108, %110 : vector<2x128xf32>
    %112 = vector.extract_strided_slice %111 {offsets = [0, 0], sizes = [2, 96], strides = [1, 1]} : vector<2x128xf32> to vector<2x96xf32>
    %cst_42 = arith.constant 5.000000e-01 : f32
    %113 = vector.broadcast %cst_42 : f32 to vector<2x96xf32>
    %114 = arith.mulf %113, %112 : vector<2x96xf32>
    %115 = math.tanh %114 : vector<2x96xf32>
    %cst_43 = arith.constant 5.000000e-01 : f32
    %116 = vector.broadcast %cst_43 : f32 to vector<2x96xf32>
    %117 = arith.mulf %116, %115 : vector<2x96xf32>
    %cst_44 = arith.constant 5.000000e-01 : f32
    %118 = vector.broadcast %cst_44 : f32 to vector<2x96xf32>
    %119 = arith.addf %117, %118 : vector<2x96xf32>
    %120 = vector.extract_strided_slice %111 {offsets = [0, 96], sizes = [2, 32], strides = [1, 1]} : vector<2x128xf32> to vector<2x32xf32>
    %121 = math.tanh %120 : vector<2x32xf32>
    %122 = vector.extract_strided_slice %119 {offsets = [0, 32], sizes = [2, 32], strides = [1, 1]} : vector<2x96xf32> to vector<2x32xf32>
    %123 = arith.mulf %122, %100 : vector<2x32xf32>
    %124 = vector.extract_strided_slice %119 {offsets = [0, 0], sizes = [2, 32], strides = [1, 1]} : vector<2x96xf32> to vector<2x32xf32>
    %125 = arith.mulf %124, %121 : vector<2x32xf32>
    %126 = arith.addf %123, %125 : vector<2x32xf32>
    %127 = vector.extract_strided_slice %119 {offsets = [0, 64], sizes = [2, 32], strides = [1, 1]} : vector<2x96xf32> to vector<2x32xf32>
    %128 = math.tanh %126 : vector<2x32xf32>
    %129 = arith.mulf %127, %128 : vector<2x32xf32>
    %130 = vector.extract_strided_slice %129 {offsets = [0, 0], sizes = [2, 16], strides = [1, 1]} : vector<2x32xf32> to vector<2x16xf32>
    %c4 = arith.constant 4 : index
    %c0_45 = arith.constant 0 : index
    %131 = vector.load %arg15[%c4, %c0_45] : memref<16x32xf32, #tpu.memory_space<vmem>>, vector<2x16xf32>
    tpu.vector_store %arg15[%c4, %c0_45], %130 {strides = array<i32>} : memref<16x32xf32, #tpu.memory_space<vmem>>, vector<2x16xf32>,
    %132 = vector.extract_strided_slice %129 {offsets = [0, 16], sizes = [2, 16], strides = [1, 1]} : vector<2x32xf32> to vector<2x16xf32>
    %c10 = arith.constant 10 : index
    %c16_46 = arith.constant 16 : index
    %133 = vector.load %arg15[%c10, %c16_46] : memref<16x32xf32, #tpu.memory_space<vmem>>, vector<2x16xf32>
    tpu.vector_store %arg15[%c10, %c16_46], %132 {strides = array<i32>} : memref<16x32xf32, #tpu.memory_space<vmem>>, vector<2x16xf32>,
    %134 = vector.extract_strided_slice %52 {offsets = [6, 0], sizes = [2, 128], strides = [1, 1]} : vector<16x128xf32> to vector<2x128xf32>
    %135 = arith.truncf %129 : vector<2x32xf32> to vector<2x32xbf16>
    %cst_47 = arith.constant dense<0.000000e+00> : vector<2x128xf32>
    %136 = tpu.matmul %135, %53, %cst_47 {dimension_numbers = #tpu.dot_dimension_numbers<[1], [0], [0], [1], [0, 0, 1, 1], [], []>} : vector<2x32xbf16>, vector<32x128xbf16>, vector<2x128xf32> -> vector<2x128xf32>
    %137 = arith.addf %134, %136 : vector<2x128xf32>
    %138 = vector.extract_strided_slice %137 {offsets = [0, 0], sizes = [2, 96], strides = [1, 1]} : vector<2x128xf32> to vector<2x96xf32>
    %cst_48 = arith.constant 5.000000e-01 : f32
    %139 = vector.broadcast %cst_48 : f32 to vector<2x96xf32>
    %140 = arith.mulf %139, %138 : vector<2x96xf32>
    %141 = math.tanh %140 : vector<2x96xf32>
    %cst_49 = arith.constant 5.000000e-01 : f32
    %142 = vector.broadcast %cst_49 : f32 to vector<2x96xf32>
    %143 = arith.mulf %142, %141 : vector<2x96xf32>
    %cst_50 = arith.constant 5.000000e-01 : f32
    %144 = vector.broadcast %cst_50 : f32 to vector<2x96xf32>
    %145 = arith.addf %143, %144 : vector<2x96xf32>
    %146 = vector.extract_strided_slice %137 {offsets = [0, 96], sizes = [2, 32], strides = [1, 1]} : vector<2x128xf32> to vector<2x32xf32>
    %147 = math.tanh %146 : vector<2x32xf32>
    %148 = vector.extract_strided_slice %145 {offsets = [0, 32], sizes = [2, 32], strides = [1, 1]} : vector<2x96xf32> to vector<2x32xf32>
    %149 = arith.mulf %148, %126 : vector<2x32xf32>
    %150 = vector.extract_strided_slice %145 {offsets = [0, 0], sizes = [2, 32], strides = [1, 1]} : vector<2x96xf32> to vector<2x32xf32>
    %151 = arith.mulf %150, %147 : vector<2x32xf32>
    %152 = arith.addf %149, %151 : vector<2x32xf32>
    %153 = vector.extract_strided_slice %145 {offsets = [0, 64], sizes = [2, 32], strides = [1, 1]} : vector<2x96xf32> to vector<2x32xf32>
    %154 = math.tanh %152 : vector<2x32xf32>
    %155 = arith.mulf %153, %154 : vector<2x32xf32>
    %156 = vector.extract_strided_slice %155 {offsets = [0, 0], sizes = [2, 16], strides = [1, 1]} : vector<2x32xf32> to vector<2x16xf32>
    %c6 = arith.constant 6 : index
    %c0_51 = arith.constant 0 : index
    %157 = vector.load %arg15[%c6, %c0_51] : memref<16x32xf32, #tpu.memory_space<vmem>>, vector<2x16xf32>
    tpu.vector_store %arg15[%c6, %c0_51], %156 {strides = array<i32>} : memref<16x32xf32, #tpu.memory_space<vmem>>, vector<2x16xf32>,
    %158 = vector.extract_strided_slice %155 {offsets = [0, 16], sizes = [2, 16], strides = [1, 1]} : vector<2x32xf32> to vector<2x16xf32>
    %c8 = arith.constant 8 : index
    %c16_52 = arith.constant 16 : index
    %159 = vector.load %arg15[%c8, %c16_52] : memref<16x32xf32, #tpu.memory_space<vmem>>, vector<2x16xf32>
    tpu.vector_store %arg15[%c8, %c16_52], %158 {strides = array<i32>} : memref<16x32xf32, #tpu.memory_space<vmem>>, vector<2x16xf32>,
    %160 = vector.extract_strided_slice %52 {offsets = [8, 0], sizes = [2, 128], strides = [1, 1]} : vector<16x128xf32> to vector<2x128xf32>
    %161 = arith.truncf %155 : vector<2x32xf32> to vector<2x32xbf16>
    %cst_53 = arith.constant dense<0.000000e+00> : vector<2x128xf32>
    %162 = tpu.matmul %161, %53, %cst_53 {dimension_numbers = #tpu.dot_dimension_numbers<[1], [0], [0], [1], [0, 0, 1, 1], [], []>} : vector<2x32xbf16>, vector<32x128xbf16>, vector<2x128xf32> -> vector<2x128xf32>
    %163 = arith.addf %160, %162 : vector<2x128xf32>
    %164 = vector.extract_strided_slice %163 {offsets = [0, 0], sizes = [2, 96], strides = [1, 1]} : vector<2x128xf32> to vector<2x96xf32>
    %cst_54 = arith.constant 5.000000e-01 : f32
    %165 = vector.broadcast %cst_54 : f32 to vector<2x96xf32>
    %166 = arith.mulf %165, %164 : vector<2x96xf32>
    %167 = math.tanh %166 : vector<2x96xf32>
    %cst_55 = arith.constant 5.000000e-01 : f32
    %168 = vector.broadcast %cst_55 : f32 to vector<2x96xf32>
    %169 = arith.mulf %168, %167 : vector<2x96xf32>
    %cst_56 = arith.constant 5.000000e-01 : f32
    %170 = vector.broadcast %cst_56 : f32 to vector<2x96xf32>
    %171 = arith.addf %169, %170 : vector<2x96xf32>
    %172 = vector.extract_strided_slice %163 {offsets = [0, 96], sizes = [2, 32], strides = [1, 1]} : vector<2x128xf32> to vector<2x32xf32>
    %173 = math.tanh %172 : vector<2x32xf32>
    %174 = vector.extract_strided_slice %171 {offsets = [0, 32], sizes = [2, 32], strides = [1, 1]} : vector<2x96xf32> to vector<2x32xf32>
    %175 = arith.mulf %174, %152 : vector<2x32xf32>
    %176 = vector.extract_strided_slice %171 {offsets = [0, 0], sizes = [2, 32], strides = [1, 1]} : vector<2x96xf32> to vector<2x32xf32>
    %177 = arith.mulf %176, %173 : vector<2x32xf32>
    %178 = arith.addf %175, %177 : vector<2x32xf32>
    %179 = vector.extract_strided_slice %171 {offsets = [0, 64], sizes = [2, 32], strides = [1, 1]} : vector<2x96xf32> to vector<2x32xf32>
    %180 = math.tanh %178 : vector<2x32xf32>
    %181 = arith.mulf %179, %180 : vector<2x32xf32>
    %182 = vector.extract_strided_slice %181 {offsets = [0, 0], sizes = [2, 16], strides = [1, 1]} : vector<2x32xf32> to vector<2x16xf32>
    %c8_57 = arith.constant 8 : index
    %c0_58 = arith.constant 0 : index
    %183 = vector.load %arg15[%c8_57, %c0_58] : memref<16x32xf32, #tpu.memory_space<vmem>>, vector<2x16xf32>
    tpu.vector_store %arg15[%c8_57, %c0_58], %182 {strides = array<i32>} : memref<16x32xf32, #tpu.memory_space<vmem>>, vector<2x16xf32>,
    %184 = vector.extract_strided_slice %181 {offsets = [0, 16], sizes = [2, 16], strides = [1, 1]} : vector<2x32xf32> to vector<2x16xf32>
    %c6_59 = arith.constant 6 : index
    %c16_60 = arith.constant 16 : index
    %185 = vector.load %arg15[%c6_59, %c16_60] : memref<16x32xf32, #tpu.memory_space<vmem>>, vector<2x16xf32>
    tpu.vector_store %arg15[%c6_59, %c16_60], %184 {strides = array<i32>} : memref<16x32xf32, #tpu.memory_space<vmem>>, vector<2x16xf32>,
    %186 = vector.extract_strided_slice %52 {offsets = [10, 0], sizes = [2, 128], strides = [1, 1]} : vector<16x128xf32> to vector<2x128xf32>
    %187 = arith.truncf %181 : vector<2x32xf32> to vector<2x32xbf16>
    %cst_61 = arith.constant dense<0.000000e+00> : vector<2x128xf32>
    %188 = tpu.matmul %187, %53, %cst_61 {dimension_numbers = #tpu.dot_dimension_numbers<[1], [0], [0], [1], [0, 0, 1, 1], [], []>} : vector<2x32xbf16>, vector<32x128xbf16>, vector<2x128xf32> -> vector<2x128xf32>
    %189 = arith.addf %186, %188 : vector<2x128xf32>
    %190 = vector.extract_strided_slice %189 {offsets = [0, 0], sizes = [2, 96], strides = [1, 1]} : vector<2x128xf32> to vector<2x96xf32>
    %cst_62 = arith.constant 5.000000e-01 : f32
    %191 = vector.broadcast %cst_62 : f32 to vector<2x96xf32>
    %192 = arith.mulf %191, %190 : vector<2x96xf32>
    %193 = math.tanh %192 : vector<2x96xf32>
    %cst_63 = arith.constant 5.000000e-01 : f32
    %194 = vector.broadcast %cst_63 : f32 to vector<2x96xf32>
    %195 = arith.mulf %194, %193 : vector<2x96xf32>
    %cst_64 = arith.constant 5.000000e-01 : f32
    %196 = vector.broadcast %cst_64 : f32 to vector<2x96xf32>
    %197 = arith.addf %195, %196 : vector<2x96xf32>
    %198 = vector.extract_strided_slice %189 {offsets = [0, 96], sizes = [2, 32], strides = [1, 1]} : vector<2x128xf32> to vector<2x32xf32>
    %199 = math.tanh %198 : vector<2x32xf32>
    %200 = vector.extract_strided_slice %197 {offsets = [0, 32], sizes = [2, 32], strides = [1, 1]} : vector<2x96xf32> to vector<2x32xf32>
    %201 = arith.mulf %200, %178 : vector<2x32xf32>
    %202 = vector.extract_strided_slice %197 {offsets = [0, 0], sizes = [2, 32], strides = [1, 1]} : vector<2x96xf32> to vector<2x32xf32>
    %203 = arith.mulf %202, %199 : vector<2x32xf32>
    %204 = arith.addf %201, %203 : vector<2x32xf32>
    %205 = vector.extract_strided_slice %197 {offsets = [0, 64], sizes = [2, 32], strides = [1, 1]} : vector<2x96xf32> to vector<2x32xf32>
    %206 = math.tanh %204 : vector<2x32xf32>
    %207 = arith.mulf %205, %206 : vector<2x32xf32>
    %208 = vector.extract_strided_slice %207 {offsets = [0, 0], sizes = [2, 16], strides = [1, 1]} : vector<2x32xf32> to vector<2x16xf32>
    %c10_65 = arith.constant 10 : index
    %c0_66 = arith.constant 0 : index
    %209 = vector.load %arg15[%c10_65, %c0_66] : memref<16x32xf32, #tpu.memory_space<vmem>>, vector<2x16xf32>
    tpu.vector_store %arg15[%c10_65, %c0_66], %208 {strides = array<i32>} : memref<16x32xf32, #tpu.memory_space<vmem>>, vector<2x16xf32>,
    %210 = vector.extract_strided_slice %207 {offsets = [0, 16], sizes = [2, 16], strides = [1, 1]} : vector<2x32xf32> to vector<2x16xf32>
    %c4_67 = arith.constant 4 : index
    %c16_68 = arith.constant 16 : index
    %211 = vector.load %arg15[%c4_67, %c16_68] : memref<16x32xf32, #tpu.memory_space<vmem>>, vector<2x16xf32>
    tpu.vector_store %arg15[%c4_67, %c16_68], %210 {strides = array<i32>} : memref<16x32xf32, #tpu.memory_space<vmem>>, vector<2x16xf32>,
    %212 = vector.extract_strided_slice %52 {offsets = [12, 0], sizes = [2, 128], strides = [1, 1]} : vector<16x128xf32> to vector<2x128xf32>
    %213 = arith.truncf %207 : vector<2x32xf32> to vector<2x32xbf16>
    %cst_69 = arith.constant dense<0.000000e+00> : vector<2x128xf32>
    %214 = tpu.matmul %213, %53, %cst_69 {dimension_numbers = #tpu.dot_dimension_numbers<[1], [0], [0], [1], [0, 0, 1, 1], [], []>} : vector<2x32xbf16>, vector<32x128xbf16>, vector<2x128xf32> -> vector<2x128xf32>
    %215 = arith.addf %212, %214 : vector<2x128xf32>
    %216 = vector.extract_strided_slice %215 {offsets = [0, 0], sizes = [2, 96], strides = [1, 1]} : vector<2x128xf32> to vector<2x96xf32>
    %cst_70 = arith.constant 5.000000e-01 : f32
    %217 = vector.broadcast %cst_70 : f32 to vector<2x96xf32>
    %218 = arith.mulf %217, %216 : vector<2x96xf32>
    %219 = math.tanh %218 : vector<2x96xf32>
    %cst_71 = arith.constant 5.000000e-01 : f32
    %220 = vector.broadcast %cst_71 : f32 to vector<2x96xf32>
    %221 = arith.mulf %220, %219 : vector<2x96xf32>
    %cst_72 = arith.constant 5.000000e-01 : f32
    %222 = vector.broadcast %cst_72 : f32 to vector<2x96xf32>
    %223 = arith.addf %221, %222 : vector<2x96xf32>
    %224 = vector.extract_strided_slice %215 {offsets = [0, 96], sizes = [2, 32], strides = [1, 1]} : vector<2x128xf32> to vector<2x32xf32>
    %225 = math.tanh %224 : vector<2x32xf32>
    %226 = vector.extract_strided_slice %223 {offsets = [0, 32], sizes = [2, 32], strides = [1, 1]} : vector<2x96xf32> to vector<2x32xf32>
    %227 = arith.mulf %226, %204 : vector<2x32xf32>
    %228 = vector.extract_strided_slice %223 {offsets = [0, 0], sizes = [2, 32], strides = [1, 1]} : vector<2x96xf32> to vector<2x32xf32>
    %229 = arith.mulf %228, %225 : vector<2x32xf32>
    %230 = arith.addf %227, %229 : vector<2x32xf32>
    %231 = vector.extract_strided_slice %223 {offsets = [0, 64], sizes = [2, 32], strides = [1, 1]} : vector<2x96xf32> to vector<2x32xf32>
    %232 = math.tanh %230 : vector<2x32xf32>
    %233 = arith.mulf %231, %232 : vector<2x32xf32>
    %234 = vector.extract_strided_slice %233 {offsets = [0, 0], sizes = [2, 16], strides = [1, 1]} : vector<2x32xf32> to vector<2x16xf32>
    %c12_73 = arith.constant 12 : index
    %c0_74 = arith.constant 0 : index
    %235 = vector.load %arg15[%c12_73, %c0_74] : memref<16x32xf32, #tpu.memory_space<vmem>>, vector<2x16xf32>
    tpu.vector_store %arg15[%c12_73, %c0_74], %234 {strides = array<i32>} : memref<16x32xf32, #tpu.memory_space<vmem>>, vector<2x16xf32>,
    %236 = vector.extract_strided_slice %233 {offsets = [0, 16], sizes = [2, 16], strides = [1, 1]} : vector<2x32xf32> to vector<2x16xf32>
    %c2_75 = arith.constant 2 : index
    %c16_76 = arith.constant 16 : index
    %237 = vector.load %arg15[%c2_75, %c16_76] : memref<16x32xf32, #tpu.memory_space<vmem>>, vector<2x16xf32>
    tpu.vector_store %arg15[%c2_75, %c16_76], %236 {strides = array<i32>} : memref<16x32xf32, #tpu.memory_space<vmem>>, vector<2x16xf32>,
    %238 = vector.extract_strided_slice %52 {offsets = [14, 0], sizes = [2, 128], strides = [1, 1]} : vector<16x128xf32> to vector<2x128xf32>
    %239 = arith.truncf %233 : vector<2x32xf32> to vector<2x32xbf16>
    %cst_77 = arith.constant dense<0.000000e+00> : vector<2x128xf32>
    %240 = tpu.matmul %239, %53, %cst_77 {dimension_numbers = #tpu.dot_dimension_numbers<[1], [0], [0], [1], [0, 0, 1, 1], [], []>} : vector<2x32xbf16>, vector<32x128xbf16>, vector<2x128xf32> -> vector<2x128xf32>
    %241 = arith.addf %238, %240 : vector<2x128xf32>
    %242 = vector.extract_strided_slice %241 {offsets = [0, 0], sizes = [2, 96], strides = [1, 1]} : vector<2x128xf32> to vector<2x96xf32>
    %cst_78 = arith.constant 5.000000e-01 : f32
    %243 = vector.broadcast %cst_78 : f32 to vector<2x96xf32>
    %244 = arith.mulf %243, %242 : vector<2x96xf32>
    %245 = math.tanh %244 : vector<2x96xf32>
    %cst_79 = arith.constant 5.000000e-01 : f32
    %246 = vector.broadcast %cst_79 : f32 to vector<2x96xf32>
    %247 = arith.mulf %246, %245 : vector<2x96xf32>
    %cst_80 = arith.constant 5.000000e-01 : f32
    %248 = vector.broadcast %cst_80 : f32 to vector<2x96xf32>
    %249 = arith.addf %247, %248 : vector<2x96xf32>
    %250 = vector.extract_strided_slice %241 {offsets = [0, 96], sizes = [2, 32], strides = [1, 1]} : vector<2x128xf32> to vector<2x32xf32>
    %251 = math.tanh %250 : vector<2x32xf32>
    %252 = vector.extract_strided_slice %249 {offsets = [0, 32], sizes = [2, 32], strides = [1, 1]} : vector<2x96xf32> to vector<2x32xf32>
    %253 = arith.mulf %252, %230 : vector<2x32xf32>
    %254 = vector.extract_strided_slice %249 {offsets = [0, 0], sizes = [2, 32], strides = [1, 1]} : vector<2x96xf32> to vector<2x32xf32>
    %255 = arith.mulf %254, %251 : vector<2x32xf32>
    %256 = arith.addf %253, %255 : vector<2x32xf32>
    %257 = vector.extract_strided_slice %249 {offsets = [0, 64], sizes = [2, 32], strides = [1, 1]} : vector<2x96xf32> to vector<2x32xf32>
    %258 = math.tanh %256 : vector<2x32xf32>
    %259 = arith.mulf %257, %258 : vector<2x32xf32>
    %260 = vector.extract_strided_slice %259 {offsets = [0, 0], sizes = [2, 16], strides = [1, 1]} : vector<2x32xf32> to vector<2x16xf32>
    %c14_81 = arith.constant 14 : index
    %c0_82 = arith.constant 0 : index
    %261 = vector.load %arg15[%c14_81, %c0_82] : memref<16x32xf32, #tpu.memory_space<vmem>>, vector<2x16xf32>
    tpu.vector_store %arg15[%c14_81, %c0_82], %260 {strides = array<i32>} : memref<16x32xf32, #tpu.memory_space<vmem>>, vector<2x16xf32>,
    %262 = vector.extract_strided_slice %259 {offsets = [0, 16], sizes = [2, 16], strides = [1, 1]} : vector<2x32xf32> to vector<2x16xf32>
    %c0_83 = arith.constant 0 : index
    %c16_84 = arith.constant 16 : index
    %263 = vector.load %arg15[%c0_83, %c16_84] : memref<16x32xf32, #tpu.memory_space<vmem>>, vector<2x16xf32>
    tpu.vector_store %arg15[%c0_83, %c16_84], %262 {strides = array<i32>} : memref<16x32xf32, #tpu.memory_space<vmem>>, vector<2x16xf32>,
    %c0_85 = arith.constant 0 : index
    %c0_86 = arith.constant 0 : index
    %264 = vector.load %arg15[%c0_85, %c0_86] : memref<16x32xf32, #tpu.memory_space<vmem>>, vector<16x32xf32>
    %265 = arith.addf %0, %264 : vector<16x32xf32>
    %c0_87 = arith.constant 0 : index
    %c0_88 = arith.constant 0 : index
    %266 = vector.load %arg8[%c0_87, %c0_88] : memref<32x64xf32, #tpu.memory_space<vmem>>, vector<32x64xf32>
    %cst_89 = arith.constant dense<0.000000e+00> : vector<16x64xf32>
    %267 = tpu.matmul %265, %266, %cst_89 {dimension_numbers = #tpu.dot_dimension_numbers<[1], [0], [0], [1], [0, 0, 1, 1], [], []>} : vector<16x32xf32>, vector<32x64xf32>, vector<16x64xf32> -> vector<16x64xf32>
    %c0_90 = arith.constant 0 : index
    %c0_91 = arith.constant 0 : index
    %268 = vector.load %arg9[%c0_90, %c0_91] : memref<1x64xf32, #tpu.memory_space<vmem>>, vector<1x64xf32>
    %269 = vector.broadcast %268 : vector<1x64xf32> to vector<16x64xf32>
    %270 = arith.addf %267, %269 : vector<16x64xf32>
    %cst_92 = arith.constant 0.000000e+00 : f32
    %271 = vector.broadcast %cst_92 : f32 to vector<16x64xf32>
    %272 = arith.maximumf %270, %271 : vector<16x64xf32>
    %c0_93 = arith.constant 0 : index
    %c0_94 = arith.constant 0 : index
    %273 = vector.load %arg10[%c0_93, %c0_94] : memref<64x32xf32, #tpu.memory_space<vmem>>, vector<64x32xf32>
    %cst_95 = arith.constant dense<0.000000e+00> : vector<16x32xf32>
    %274 = tpu.matmul %272, %273, %cst_95 {dimension_numbers = #tpu.dot_dimension_numbers<[1], [0], [0], [1], [0, 0, 1, 1], [], []>} : vector<16x64xf32>, vector<64x32xf32>, vector<16x32xf32> -> vector<16x32xf32>
    %c0_96 = arith.constant 0 : index
    %c0_97 = arith.constant 0 : index
    %275 = vector.load %arg11[%c0_96, %c0_97] : memref<1x32xf32, #tpu.memory_space<vmem>>, vector<1x32xf32>
    %276 = vector.broadcast %275 : vector<1x32xf32> to vector<16x32xf32>
    %277 = arith.addf %274, %276 : vector<16x32xf32>
    %278 = arith.addf %265, %277 : vector<16x32xf32>
    %c0_98 = arith.constant 0 : index
    %c0_99 = arith.constant 0 : index
    %279 = vector.load %arg12[%c0_98, %c0_99] : memref<16x32xf32, #tpu.memory_space<vmem>>, vector<16x32xf32>
    tpu.vector_store %arg12[%c0_98, %c0_99], %278 {strides = array<i32>} : memref<16x32xf32, #tpu.memory_space<vmem>>, vector<16x32xf32>,
    %280 = vector.extract_strided_slice %259 {offsets = [0, 0], sizes = [2, 16], strides = [1, 1]} : vector<2x32xf32> to vector<2x16xf32>
    %c0_100 = arith.constant 0 : index
    %c0_101 = arith.constant 0 : index
    %281 = vector.load %arg13[%c0_100, %c0_101] : memref<4x16xf32, #tpu.memory_space<vmem>>, vector<2x16xf32>
    tpu.vector_store %arg13[%c0_100, %c0_101], %280 {strides = array<i32>} : memref<4x16xf32, #tpu.memory_space<vmem>>, vector<2x16xf32>,
    %282 = vector.extract_strided_slice %259 {offsets = [0, 16], sizes = [2, 16], strides = [1, 1]} : vector<2x32xf32> to vector<2x16xf32>
    %c2_102 = arith.constant 2 : index
    %c0_103 = arith.constant 0 : index
    %283 = vector.load %arg13[%c2_102, %c0_103] : memref<4x16xf32, #tpu.memory_space<vmem>>, vector<2x16xf32>
    tpu.vector_store %arg13[%c2_102, %c0_103], %282 {strides = array<i32>} : memref<4x16xf32, #tpu.memory_space<vmem>>, vector<2x16xf32>,
    %284 = vector.extract_strided_slice %256 {offsets = [0, 0], sizes = [2, 16], strides = [1, 1]} : vector<2x32xf32> to vector<2x16xf32>
    %c0_104 = arith.constant 0 : index
    %c0_105 = arith.constant 0 : index
    %285 = vector.load %arg14[%c0_104, %c0_105] : memref<4x16xf32, #tpu.memory_space<vmem>>, vector<2x16xf32>
    tpu.vector_store %arg14[%c0_104, %c0_105], %284 {strides = array<i32>} : memref<4x16xf32, #tpu.memory_space<vmem>>, vector<2x16xf32>,
    %286 = vector.extract_strided_slice %256 {offsets = [0, 16], sizes = [2, 16], strides = [1, 1]} : vector<2x32xf32> to vector<2x16xf32>
    %c2_106 = arith.constant 2 : index
    %c0_107 = arith.constant 0 : index
    %287 = vector.load %arg14[%c2_106, %c0_107] : memref<4x16xf32, #tpu.memory_space<vmem>>, vector<2x16xf32>
    tpu.vector_store %arg14[%c2_106, %c0_107], %286 {strides = array<i32>} : memref<4x16xf32, #tpu.memory_space<vmem>>, vector<2x16xf32>,
    return
  }
  func.func @transform_0(%arg0: i32) -> (i32, i32) {
    %c0_i32 = arith.constant 0 : i32
    %c0_i32_0 = arith.constant 0 : i32
    %c0_i32_1 = arith.constant 0 : i32
    return %c0_i32, %c0_i32_0 : i32, i32
  }
  func.func @transform_1(%arg0: i32) -> (i32, i32) {
    %c0_i32 = arith.constant 0 : i32
    %c0_i32_0 = arith.constant 0 : i32
    %c0_i32_1 = arith.constant 0 : i32
    return %c0_i32, %c0_i32_0 : i32, i32
  }
  func.func @transform_2(%arg0: i32) -> (i32, i32) {
    %c0_i32 = arith.constant 0 : i32
    %c0_i32_0 = arith.constant 0 : i32
    %c0_i32_1 = arith.constant 0 : i32
    return %c0_i32, %c0_i32_0 : i32, i32
  }
  func.func @transform_3(%arg0: i32) -> (i32, i32) {
    %c0_i32 = arith.constant 0 : i32
    %c0_i32_0 = arith.constant 0 : i32
    %c0_i32_1 = arith.constant 0 : i32
    return %c0_i32, %c0_i32_0 : i32, i32
  }
  func.func @transform_4(%arg0: i32) -> (i32, i32) {
    %c0_i32 = arith.constant 0 : i32
    %c0_i32_0 = arith.constant 0 : i32
    %c0_i32_1 = arith.constant 0 : i32
    return %c0_i32, %c0_i32_0 : i32, i32
  }
  func.func @transform_5(%arg0: i32) -> (i32, i32) {
    %c0_i32 = arith.constant 0 : i32
    %c0_i32_0 = arith.constant 0 : i32
    %c0_i32_1 = arith.constant 0 : i32
    return %c0_i32, %c0_i32_0 : i32, i32
  }
  func.func @transform_6(%arg0: i32) -> (i32, i32) {
    %c0_i32 = arith.constant 0 : i32
    %c0_i32_0 = arith.constant 0 : i32
    %c0_i32_1 = arith.constant 0 : i32
    return %c0_i32, %c0_i32_0 : i32, i32
  }
  func.func @transform_7(%arg0: i32) -> (i32, i32) {
    %c0_i32 = arith.constant 0 : i32
    %c0_i32_0 = arith.constant 0 : i32
    %c0_i32_1 = arith.constant 0 : i32
    return %c0_i32, %c0_i32_0 : i32, i32
  }
  func.func @transform_8(%arg0: i32) -> (i32, i32) {
    %c0_i32 = arith.constant 0 : i32
    %c0_i32_0 = arith.constant 0 : i32
    %c0_i32_1 = arith.constant 0 : i32
    return %c0_i32, %c0_i32_0 : i32, i32
  }
  func.func @transform_9(%arg0: i32) -> (i32, i32) {
    %c0_i32 = arith.constant 0 : i32
    %c0_i32_0 = arith.constant 0 : i32
    %c0_i32_1 = arith.constant 0 : i32
    return %c0_i32, %c0_i32_0 : i32, i32
  }
  func.func @transform_10(%arg0: i32) -> (i32, i32) {
    %c0_i32 = arith.constant 0 : i32
    %c0_i32_0 = arith.constant 0 : i32
    %c0_i32_1 = arith.constant 0 : i32
    return %c0_i32, %c0_i32_0 : i32, i32
  }
  func.func @transform_11(%arg0: i32) -> (i32, i32) {
    %c0_i32 = arith.constant 0 : i32
    %c0_i32_0 = arith.constant 0 : i32
    %c0_i32_1 = arith.constant 0 : i32
    return %c0_i32, %c0_i32_0 : i32, i32
  }
  func.func @transform_12(%arg0: i32) -> (i32, i32) {
    %c0_i32 = arith.constant 0 : i32
    %c0_i32_0 = arith.constant 0 : i32
    %c0_i32_1 = arith.constant 0 : i32
    return %c0_i32, %c0_i32_0 : i32, i32
  }
  func.func @transform_13(%arg0: i32) -> (i32, i32) {
    %c0_i32 = arith.constant 0 : i32
    %c0_i32_0 = arith.constant 0 : i32
    %c0_i32_1 = arith.constant 0 : i32
    return %c0_i32, %c0_i32_0 : i32, i32
  }
}

</mosaic_0001>

<llo_original>
// kernel: encoder_layer_forward.1
$region0: #{encoder_layer_forward.1}
  #allocation0 [shape = 'u32[]', space=smem, size = 0x4, offset = 0x4, fixed_abs, tag = 'smem constant byte address 0x4 - core index']
  #allocation1 [shape = 'u32[144,128]{1,0:T(1,128)}', space=vmem, size = 0x12000, scoped, tag = 'internal scratch']
  #allocation2 [shape = 'f32[16,32]{1,0:T(8,128)}', space=vmem, size = 0x2000, scoped, tag = 'scratch operand']
  %s0 = inlined_call_operand.vmem [shape: f32[16,32], index: 0, kind: input, shape index: {}]
  %s1 = inlined_call_operand.vmem [shape: f32[16,32], index: 1, kind: input, shape index: {}]
  %s2 = inlined_call_operand.vmem [shape: f32[1,32], index: 2, kind: input, shape index: {}]
  %s3 = inlined_call_operand.vmem [shape: f32[1,32], index: 3, kind: input, shape index: {}]
  %s4 = inlined_call_operand.vmem [shape: bf16[64,128], index: 4, kind: input, shape index: {}]
  %s5 = inlined_call_operand.vmem [shape: bf16[32,128], index: 5, kind: input, shape index: {}]
  %s6 = inlined_call_operand.vmem [shape: f32[1,128], index: 6, kind: input, shape index: {}]
  %s7 = inlined_call_operand.vmem [shape: f32[32,64], index: 7, kind: input, shape index: {}]
  %s8 = inlined_call_operand.vmem [shape: f32[1,64], index: 8, kind: input, shape index: {}]
  %s9 = inlined_call_operand.vmem [shape: f32[64,32], index: 9, kind: input, shape index: {}]
  %s10 = inlined_call_operand.vmem [shape: f32[1,32], index: 10, kind: input, shape index: {}]
  %s11 = inlined_call_operand.hbm [shape: f32[16,32], index: 11, kind: output, shape index: {0}]
  %s12 = inlined_call_operand.hbm [shape: f32[4,16], index: 12, kind: output, shape index: {1}]
  %s13 = inlined_call_operand.hbm [shape: f32[4,16], index: 13, kind: output, shape index: {2}]
  %14 = xla_tuple %s11, %s12, %s13
  %s15 = sld [smem:[#allocation0]]
  $region70: #{encoder_layer_forward.1} parent=0
    _
  %s17 = ssub.s32 1, %s15
  %s18 = scalar_select 0, %s17, %s15
  $region1: #{encoder_layer_forward.1} parent=0
    #allocation3 [shape = 'u8[8192]{0}', space=vmem, size = 0x2000, scoped, tag = 'output window, operand 0, single buffered']
    #allocation4 [shape = 's32[1]{0}', space=sflag, size = 0x4, scoped, tag = 'scoped memory for encoder_layer_forward.1']
    #allocation5 [shape = 'u8[2048]{0}', space=vmem, size = 0x800, scoped, tag = 'output window, operand 1, single buffered']
    #allocation6 [shape = 's32[1]{0}', space=sflag, size = 0x4, scoped, tag = 'scoped memory for encoder_layer_forward.1']
    #allocation7 [shape = 'u8[2048]{0}', space=vmem, size = 0x800, scoped, tag = 'output window, operand 2, single buffered']
    %19 = vsyncpa [#allocation4], 0
    %20 = vsyncpa [#allocation6], 0
    // Predicated region
    $region2: #{encoder_layer_forward.1} parent=1 // pred_check
      _
    $region3: #{encoder_layer_forward.1} parent=1 // pred_check_branch
      %22 = sbr.rel (0) target = $region5
    $region4: #{encoder_layer_forward.1} parent=1 // pred_region
      _
    $region5: #{encoder_layer_forward.1} parent=1 // pred_fallthru
      _
    // Predicated region
    $region6: #{encoder_layer_forward.1} parent=1 // pred_check
      _
    $region7: #{encoder_layer_forward.1} parent=1 // pred_check_branch
      %24 = sbr.rel (0) target = $region9
    $region8: #{encoder_layer_forward.1} parent=1 // pred_region
      _
    $region9: #{encoder_layer_forward.1} parent=1 // pred_fallthru
      _
    // Predicated region
    $region10: #{encoder_layer_forward.1} parent=1 // pred_check
      _
    $region11: #{encoder_layer_forward.1} parent=1 // pred_check_branch
      %26 = sbr.rel (0) target = $region13
    $region12: #{encoder_layer_forward.1} parent=1 // pred_region
      _
    $region13: #{encoder_layer_forward.1} parent=1 // pred_fallthru
      _
    // Predicated region
    $region14: #{encoder_layer_forward.1} parent=1 // pred_check
      _
    $region15: #{encoder_layer_forward.1} parent=1 // pred_check_branch
      %28 = sbr.rel (0) target = $region17
    $region16: #{encoder_layer_forward.1} parent=1 // pred_region
      _
    $region17: #{encoder_layer_forward.1} parent=1 // pred_fallthru
      _
    // Predicated region
    $region18: #{encoder_layer_forward.1} parent=1 // pred_check
      _
    $region19: #{encoder_layer_forward.1} parent=1 // pred_check_branch
      %30 = sbr.rel (0) target = $region21
    $region20: #{encoder_layer_forward.1} parent=1 // pred_region
      _
    $region21: #{encoder_layer_forward.1} parent=1 // pred_fallthru
      _
    // Predicated region
    $region22: #{encoder_layer_forward.1} parent=1 // pred_check
      _
    $region23: #{encoder_layer_forward.1} parent=1 // pred_check_branch
      %32 = sbr.rel (0) target = $region25
    $region24: #{encoder_layer_forward.1} parent=1 // pred_region
      _
    $region25: #{encoder_layer_forward.1} parent=1 // pred_fallthru
      _
    // Predicated region
    $region26: #{encoder_layer_forward.1} parent=1 // pred_check
      _
    $region27: #{encoder_layer_forward.1} parent=1 // pred_check_branch
      %34 = sbr.rel (0) target = $region29
    $region28: #{encoder_layer_forward.1} parent=1 // pred_region
      _
    $region29: #{encoder_layer_forward.1} parent=1 // pred_fallthru
      _
    // Predicated region
    $region30: #{encoder_layer_forward.1} parent=1 // pred_check
      _
    $region31: #{encoder_layer_forward.1} parent=1 // pred_check_branch
      %36 = sbr.rel (0) target = $region33
    $region32: #{encoder_layer_forward.1} parent=1 // pred_region
      _
    $region33: #{encoder_layer_forward.1} parent=1 // pred_fallthru
      _
    // Predicated region
    $region34: #{encoder_layer_forward.1} parent=1 // pred_check
      _
    $region35: #{encoder_layer_forward.1} parent=1 // pred_check_branch
      %38 = sbr.rel (0) target = $region37
    $region36: #{encoder_layer_forward.1} parent=1 // pred_region
      _
    $region37: #{encoder_layer_forward.1} parent=1 // pred_fallthru
      _
    // Predicated region
    $region38: #{encoder_layer_forward.1} parent=1 // pred_check
      _
    $region39: #{encoder_layer_forward.1} parent=1 // pred_check_branch
      %40 = sbr.rel (0) target = $region41
    $region40: #{encoder_layer_forward.1} parent=1 // pred_region
      _
    $region41: #{encoder_layer_forward.1} parent=1 // pred_fallthru
      _
    // Predicated region
    $region42: #{encoder_layer_forward.1} parent=1 // pred_check
      _
    $region43: #{encoder_layer_forward.1} parent=1 // pred_check_branch
      %42 = sbr.rel (0) target = $region45
    $region44: #{encoder_layer_forward.1} parent=1 // pred_region
      _
    $region45: #{encoder_layer_forward.1} parent=1 // pred_fallthru
      _
    %v44 = vld [vmem:[%s0] sm:$0xff]
    %v45 = vld [vmem:[%s0 + $0x8] sm:$0xff]
    %vm46 = vcmask 261120
    %v47 = vsel %vm46, %v44, 0.0
    %48 = vadd.xlane.f32.xlu0 %v47
    %v49 = vpop.xlane.xlu0 %48
    %v50 = vsel %vm46, %v45, 0.0
    %51 = vadd.xlane.f32.xlu0 %v50
    %v52 = vpop.xlane.xlu0 %51
    %v53 = vrcp.pop 32.0
    %v54 = vmul.f32 %v49, %v53
    %v55 = vmul.f32 %v52, %v53
    %v56 = vsub.f32 %v44, %v54
    %v57 = vsub.f32 %v45, %v55
    %v58 = vmul.f32 %v56, %v56
    %v59 = vmul.f32 %v57, %v57
    %v60 = vsel %vm46, %v58, 0.0
    %61 = vadd.xlane.f32.xlu0 %v60
    %v62 = vpop.xlane.xlu0 %61
    %v63 = vsel %vm46, %v59, 0.0
    %64 = vadd.xlane.f32.xlu0 %v63
    %v65 = vpop.xlane.xlu0 %64
    %v66 = vmul.f32 %v62, %v53
    %v67 = vmul.f32 %v65, %v53
    %v68 = vadd.f32 %v66, 1e-05
    %v69 = vadd.f32 %v67, 1e-05
    %v70 = vrsqrt.pop %v68
    %v71 = vrsqrt.pop %v69
    %v72 = vmul.f32 %v56, %v70
    %v73 = vmul.f32 %v57, %v71
    %v74 = vld [vmem:[%s2] sm:$0x1]
    %v76 = vlaneseq
    %v77 = vshrl.u32 %v76, 7
    %v78 = vsub.s32 0, %v77
    %v79 = vrot.slane %v74, %v78
    %v81 = vmul.f32 %v72, %v79
    %v82 = vmul.f32 %v73, %v79
    %v83 = vld [vmem:[%s3] sm:$0x1]
    %v85 = vlaneseq
    %v86 = vshrl.u32 %v85, 7
    %v87 = vsub.s32 0, %v86
    %v88 = vrot.slane %v83, %v87
    %v90 = vadd.f32 %v81, %v88
    %v91 = vadd.f32 %v82, %v88
    %v92 = vld [vmem:[%s1] sm:$0xff]
    %v93 = vld [vmem:[%s1 + $0x8] sm:$0xff]
    %v94 = vsel %vm46, %v92, 0.0
    %95 = vadd.xlane.f32.xlu0 %v94
    %v96 = vpop.xlane.xlu0 %95
    %v97 = vsel %vm46, %v93, 0.0
    %98 = vadd.xlane.f32.xlu0 %v97
    %v99 = vpop.xlane.xlu0 %98
    %v100 = vmul.f32 %v96, %v53
    %v101 = vmul.f32 %v99, %v53
    %v102 = vsub.f32 %v92, %v100
    %v103 = vsub.f32 %v93, %v101
    %v104 = vmul.f32 %v102, %v102
    %v105 = vmul.f32 %v103, %v103
    %v106 = vsel %vm46, %v104, 0.0
    %107 = vadd.xlane.f32.xlu0 %v106
    %v108 = vpop.xlane.xlu0 %107
    %v109 = vsel %vm46, %v105, 0.0
    %110 = vadd.xlane.f32.xlu0 %v109
    %v111 = vpop.xlane.xlu0 %110
    %v112 = vmul.f32 %v108, %v53
    %v113 = vmul.f32 %v111, %v53
    %v114 = vadd.f32 %v112, 1e-05
    %v115 = vadd.f32 %v113, 1e-05
    %v116 = vrsqrt.pop %v114
    %v117 = vrsqrt.pop %v115
    %v118 = vmul.f32 %v102, %v116
    %v119 = vmul.f32 %v103, %v117
    %v120 = vmul.f32 %v118, %v79
    %v121 = vmul.f32 %v119, %v79
    %v122 = vadd.f32 %v120, %v88
    %v123 = vadd.f32 %v121, %v88
    %126 = vrot.lane.b32.xlu0 %v122, 32
    %v127 = vpop.permute.xlu0 %126
    %128 = vrot.lane.b32.xlu0 %v123, 32
    %v129 = vpop.permute.xlu0 %128
    %v132 = vsel %vm46, %v90, %v127
    %v133 = vsel %vm46, %v91, %v129
    %v134 = vpack.c.bf16 %v133, %v132
    %v135 = vld [vmem:[%s4] sm:$0xf]
    %v136 = vld [vmem:[%s4 + $0x4] sm:$0xf]
    %v137 = vld [vmem:[%s4 + $0x8] sm:$0xf]
    %v138 = vld [vmem:[%s4 + $0xc] sm:$0xf]
    %v139 = vld [vmem:[%s4 + $0x10] sm:$0xf]
    %v140 = vld [vmem:[%s4 + $0x14] sm:$0xf]
    %v141 = vld [vmem:[%s4 + $0x18] sm:$0xf]
    %v142 = vld [vmem:[%s4 + $0x1c] sm:$0xf]
    %v143 = vld [vmem:[%s6] sm:$0x1]
    %v145 = vlaneseq
    %v146 = vshrl.u32 %v145, 7
    %v147 = vsub.s32 0, %v146
    %v148 = vrot.slane %v143, %v147
    %v158 = vunpack.c.l.b16 %v135
    %v159 = vunpack.c.l.b16 %v136
    %v160 = vunpack.c.l.b16 %v137
    %v161 = vunpack.c.l.b16 %v138
    %v162 = vunpack.c.l.b16 %v139
    %v163 = vunpack.c.l.b16 %v140
    %v164 = vunpack.c.l.b16 %v141
    %v165 = vunpack.c.l.b16 %v142
    %v166 = vpack.c.b16 %v159, %v158
    %v167 = vpack.c.b16 %v161, %v160
    %v168 = vpack.c.b16 %v163, %v162
    %v169 = vpack.c.b16 %v165, %v164
    %vm174 = vcmask 523264
    %v176 = vsel %vm174, %v134, 0
    %178 = vmatprep.subr.bf16.mxu0 0
    %179 = vmatpush1.bf16.msra.mxu0 %v166
    %180 = vmatprep.subr.bf16.mxu0 0
    %181 = vmatpush1.bf16.msra.mxu0 %v167
    %182 = vmatprep.subr.bf16.mxu0 0
    %183 = vmatpush1.bf16.msra.mxu0 %v168
    %184 = vmatprep.subr.bf16.mxu0 0
    %185 = vmatpush1.bf16.msra.mxu0 %v169
    %186 = vmatprep.subr.bf16.mxu0 0
    %187 = vmatpush1.bf16.msra.mxu0 0
    %188 = vmatprep.subr.bf16.mxu0 0
    %189 = vmatpush1.bf16.msra.mxu0 0
    %190 = vmatprep.subr.bf16.mxu0 0
    %191 = vmatpush1.bf16.msra.mxu0 0
    %192 = vmatprep.subr.bf16.mxu0 0
    %193 = vmatpush1.bf16.msra.mxu0 0
    %194 = vmatprep.subr.bf16.mxu0 0
    %195 = vmatpush1.bf16.msra.mxu0 0
    %196 = vmatprep.subr.bf16.mxu0 0
    %197 = vmatpush1.bf16.msra.mxu0 0
    %198 = vmatprep.subr.bf16.mxu0 0
    %199 = vmatpush1.bf16.msra.mxu0 0
    %200 = vmatprep.subr.bf16.mxu0 0
    %201 = vmatpush1.bf16.msra.mxu0 0
    %202 = vmatprep.subr.bf16.mxu0 0
    %203 = vmatpush1.bf16.msra.mxu0 0
    %204 = vmatprep.subr.bf16.mxu0 0
    %205 = vmatpush1.bf16.msra.mxu0 0
    %206 = vmatprep.subr.bf16.mxu0 0
    %207 = vmatpush1.bf16.msra.mxu0 0
    %208 = vmatprep.subr.bf16.mxu0 0
    %209 = vmatpush1.bf16.msra.mxu0 0
    %210 = vmatprep.mubr.bf16.mxu0 0
    %211 = vmatmul.mubr.bf16.gmra.mrb[0].mxu0 %v176
    %v212 = vpop.f32.mrb[0].mxu0
    %v213 = vadd.f32 %v148, %v212
    %v214 = vpop.f32.mrb[0].mxu0
    %v215 = vpop.f32.mrb[0].mxu0
    %v216 = vadd.f32 %v148, %v215
    %v217 = vpop.f32.mrb[0].mxu0
    %218 = vdwg.mxu0
    %v219 = vld [vmem:[%s5] sm:$0xf]
    %v220 = vld [vmem:[%s5 + $0x4] sm:$0xf]
    %v221 = vld [vmem:[%s5 + $0x8] sm:$0xf]
    %v222 = vld [vmem:[%s5 + $0xc] sm:$0xf]
    %v227 = vunpack.c.l.b16 %v219
    %v228 = vunpack.c.l.b16 %v220
    %v229 = vunpack.c.l.b16 %v221
    %v230 = vunpack.c.l.b16 %v222
    %v231 = vpack.c.b16 %v228, %v227
    %v232 = vpack.c.b16 %v230, %v229
    %v236 = vsel %vm46, 0, 0
    %238 = vmatprep.subr.bf16.mxu0 0
    %239 = vmatpush1.bf16.msra.mxu0 %v231
    %240 = vmatprep.subr.bf16.mxu0 0
    %241 = vmatpush1.bf16.msra.mxu0 %v232
    %242 = vmatprep.subr.bf16.mxu0 0
    %243 = vmatpush1.bf16.msra.mxu0 0
    %244 = vmatprep.subr.bf16.mxu0 0
    %245 = vmatpush1.bf16.msra.mxu0 0
    %246 = vmatprep.subr.bf16.mxu0 0
    %247 = vmatpush1.bf16.msra.mxu0 0
    %248 = vmatprep.subr.bf16.mxu0 0
    %249 = vmatpush1.bf16.msra.mxu0 0
    %250 = vmatprep.subr.bf16.mxu0 0
    %251 = vmatpush1.bf16.msra.mxu0 0
    %252 = vmatprep.subr.bf16.mxu0 0
    %253 = vmatpush1.bf16.msra.mxu0 0
    %254 = vmatprep.subr.bf16.mxu0 0
    %255 = vmatpush1.bf16.msra.mxu0 0
    %256 = vmatprep.subr.bf16.mxu0 0
    %257 = vmatpush1.bf16.msra.mxu0 0
    %258 = vmatprep.subr.bf16.mxu0 0
    %259 = vmatpush1.bf16.msra.mxu0 0
    %260 = vmatprep.subr.bf16.mxu0 0
    %261 = vmatpush1.bf16.msra.mxu0 0
    %262 = vmatprep.subr.bf16.mxu0 0
    %263 = vmatpush1.bf16.msra.mxu0 0
    %264 = vmatprep.subr.bf16.mxu0 0
    %265 = vmatpush1.bf16.msra.mxu0 0
    %266 = vmatprep.subr.bf16.mxu0 0
    %267 = vmatpush1.bf16.msra.mxu0 0
    %268 = vmatprep.subr.bf16.mxu0 0
    %269 = vmatpush1.bf16.msra.mxu0 0
    %270 = vmatprep.mubr.bf16.mxu0 0
    %271 = vmatmul.mubr.bf16.gmra.mrb[0].mxu0 %v236
    %v272 = vpop.f32.mrb[0].mxu0
    %v273 = vadd.f32 0.0, %v272
    %v274 = vpop.f32.mrb[0].mxu0
    %v275 = vpop.f32.mrb[0].mxu0
    %v276 = vpop.f32.mrb[0].mxu0
    %277 = vdwg.mxu0
    %v278 = vadd.f32 %v213, %v273
    %v279 = vmul.f32 %v278, 0.5
    %v280 = vtanh.pop %v279
    %v281 = vmul.f32 %v280, 0.5
    %v282 = vadd.f32 %v281, 0.5
    %v283 = vtanh.pop %v278
    %v284 = vmul.f32 %v282, 0.0
    %286 = vrot.lane.b32.xlu0 %v283, 32
    %v287 = vpop.permute.xlu0 %286
    %v289 = vmul.f32 %v282, %v287
    %291 = vrot.lane.b32.xlu0 %v289, 32
    %v292 = vpop.permute.xlu0 %291
    %v294 = vadd.f32 %v284, %v292
    %v295 = vtanh.pop %v294
    %297 = vrot.lane.b32.xlu0 %v295, 32
    %v298 = vpop.permute.xlu0 %297
    %v300 = vmul.f32 %v282, %v298
    %302 = vrot.lane.b32.xlu0 %v300, 64
    %v303 = vpop.permute.xlu0 %302
    %vm305 = vcmask 123904
    %306 = vst.msk [vmem:[#allocation2] sm:$0x3] %vm305, %v303
    %vm307 = vcmask 255104
    %308 = vst.msk [vmem:[#allocation2 + $0xe] sm:$0x3] %vm307, %v303
    %v309 = vpack.c.bf16 %v300, %v300
    %311 = vrot.lane.b32.xlu0 %v309, 64
    %v312 = vpop.permute.xlu0 %311
    %v314 = vsel %vm46, %v312, 0
    %316 = vmatprep.subr.bf16.mxu0 0
    %317 = vmatpush1.bf16.msra.mxu0 %v231
    %318 = vmatprep.subr.bf16.mxu0 0
    %319 = vmatpush1.bf16.msra.mxu0 %v232
    %320 = vmatprep.subr.bf16.mxu0 0
    %321 = vmatpush1.bf16.msra.mxu0 0
    %322 = vmatprep.subr.bf16.mxu0 0
    %323 = vmatpush1.bf16.msra.mxu0 0
    %324 = vmatprep.subr.bf16.mxu0 0
    %325 = vmatpush1.bf16.msra.mxu0 0
    %326 = vmatprep.subr.bf16.mxu0 0
    %327 = vmatpush1.bf16.msra.mxu0 0
    %328 = vmatprep.subr.bf16.mxu0 0
    %329 = vmatpush1.bf16.msra.mxu0 0
    %330 = vmatprep.subr.bf16.mxu0 0
    %331 = vmatpush1.bf16.msra.mxu0 0
    %332 = vmatprep.subr.bf16.mxu0 0
    %333 = vmatpush1.bf16.msra.mxu0 0
    %334 = vmatprep.subr.bf16.mxu0 0
    %335 = vmatpush1.bf16.msra.mxu0 0
    %336 = vmatprep.subr.bf16.mxu0 0
    %337 = vmatpush1.bf16.msra.mxu0 0
    %338 = vmatprep.subr.bf16.mxu0 0
    %339 = vmatpush1.bf16.msra.mxu0 0
    %340 = vmatprep.subr.bf16.mxu0 0
    %341 = vmatpush1.bf16.msra.mxu0 0
    %342 = vmatprep.subr.bf16.mxu0 0
    %343 = vmatpush1.bf16.msra.mxu0 0
    %344 = vmatprep.subr.bf16.mxu0 0
    %345 = vmatpush1.bf16.msra.mxu0 0
    %346 = vmatprep.subr.bf16.mxu0 0
    %347 = vmatpush1.bf16.msra.mxu0 0
    %348 = vmatprep.mubr.bf16.mxu0 0
    %349 = vmatmul.mubr.bf16.gmra.mrb[0].mxu0 %v314
    %v350 = vpop.f32.mrb[0].mxu0
    %v351 = vadd.f32 0.0, %v350
    %v352 = vpop.f32.mrb[0].mxu0
    %v353 = vpop.f32.mrb[0].mxu0
    %v354 = vpop.f32.mrb[0].mxu0
    %355 = vdwg.mxu0
    %v357 = vrot.slane %v351, 6
    %v359 = vadd.f32 %v213, %v357
    %v360 = vmul.f32 %v359, 0.5
    %v361 = vtanh.pop %v360
    %v362 = vmul.f32 %v361, 0.5
    %v363 = vadd.f32 %v362, 0.5
    %v364 = vtanh.pop %v359
    %v366 = vrot.slane %v294, 6
    %v368 = vmul.f32 %v363, %v366
    %370 = vrot.lane.b32.xlu0 %v364, 32
    %v371 = vpop.permute.xlu0 %370
    %v373 = vmul.f32 %v363, %v371
    %375 = vrot.lane.b32.xlu0 %v373, 32
    %v376 = vpop.permute.xlu0 %375
    %v378 = vadd.f32 %v368, %v376
    %v379 = vtanh.pop %v378
    %381 = vrot.lane.b32.xlu0 %v379, 32
    %v382 = vpop.permute.xlu0 %381
    %v384 = vmul.f32 %v363, %v382
    %386 = vrot.lane.b32.xlu0 %v384, 64
    %v387 = vpop.permute.xlu0 %386
    %vm389 = vcmask 125954
    %390 = vst.msk [vmem:[#allocation2] sm:$0xc] %vm389, %v387
    %vm391 = vcmask 257154
    %392 = vst.msk [vmem:[#allocation2 + $0xa] sm:$0xc] %vm391, %v387
    %v393 = vpack.c.bf16 %v384, %v384
    %v395 = vrot.slane %v393, 1
    %396 = vrot.lane.b32.xlu0 %v395, 64
    %v397 = vpop.permute.xlu0 %396
    %v399 = vsel %vm46, %v397, 0
    %401 = vmatprep.subr.bf16.mxu0 0
    %402 = vmatpush1.bf16.msra.mxu0 %v231
    %403 = vmatprep.subr.bf16.mxu0 0
    %404 = vmatpush1.bf16.msra.mxu0 %v232
    %405 = vmatprep.subr.bf16.mxu0 0
    %406 = vmatpush1.bf16.msra.mxu0 0
    %407 = vmatprep.subr.bf16.mxu0 0
    %408 = vmatpush1.bf16.msra.mxu0 0
    %409 = vmatprep.subr.bf16.mxu0 0
    %410 = vmatpush1.bf16.msra.mxu0 0
    %411 = vmatprep.subr.bf16.mxu0 0
    %412 = vmatpush1.bf16.msra.mxu0 0
    %413 = vmatprep.subr.bf16.mxu0 0
    %414 = vmatpush1.bf16.msra.mxu0 0
    %415 = vmatprep.subr.bf16.mxu0 0
    %416 = vmatpush1.bf16.msra.mxu0 0
    %417 = vmatprep.subr.bf16.mxu0 0
    %418 = vmatpush1.bf16.msra.mxu0 0
    %419 = vmatprep.subr.bf16.mxu0 0
    %420 = vmatpush1.bf16.msra.mxu0 0
    %421 = vmatprep.subr.bf16.mxu0 0
    %422 = vmatpush1.bf16.msra.mxu0 0
    %423 = vmatprep.subr.bf16.mxu0 0
    %424 = vmatpush1.bf16.msra.mxu0 0
    %425 = vmatprep.subr.bf16.mxu0 0
    %426 = vmatpush1.bf16.msra.mxu0 0
    %427 = vmatprep.subr.bf16.mxu0 0
    %428 = vmatpush1.bf16.msra.mxu0 0
    %429 = vmatprep.subr.bf16.mxu0 0
    %430 = vmatpush1.bf16.msra.mxu0 0
    %431 = vmatprep.subr.bf16.mxu0 0
    %432 = vmatpush1.bf16.msra.mxu0 0
    %433 = vmatprep.mubr.bf16.mxu0 0
    %434 = vmatmul.mubr.bf16.gmra.mrb[0].mxu0 %v399
    %v435 = vpop.f32.mrb[0].mxu0
    %v436 = vadd.f32 0.0, %v435
    %v437 = vpop.f32.mrb[0].mxu0
    %v438 = vpop.f32.mrb[0].mxu0
    %v439 = vpop.f32.mrb[0].mxu0
    %440 = vdwg.mxu0
    %v442 = vrot.slane %v436, 4
    %v444 = vadd.f32 %v213, %v442
    %v445 = vmul.f32 %v444, 0.5
    %v446 = vtanh.pop %v445
    %v447 = vmul.f32 %v446, 0.5
    %v448 = vadd.f32 %v447, 0.5
    %v449 = vtanh.pop %v444
    %v451 = vrot.slane %v378, 6
    %v453 = vmul.f32 %v448, %v451
    %455 = vrot.lane.b32.xlu0 %v449, 32
    %v456 = vpop.permute.xlu0 %455
    %v458 = vmul.f32 %v448, %v456
    %460 = vrot.lane.b32.xlu0 %v458, 32
    %v461 = vpop.permute.xlu0 %460
    %v463 = vadd.f32 %v453, %v461
    %v464 = vtanh.pop %v463
    %466 = vrot.lane.b32.xlu0 %v464, 32
    %v467 = vpop.permute.xlu0 %466
    %v469 = vmul.f32 %v448, %v467
    %471 = vrot.lane.b32.xlu0 %v469, 64
    %v472 = vpop.permute.xlu0 %471
    %vm474 = vcmask 128004
    %475 = vst.msk [vmem:[#allocation2] sm:$0x30] %vm474, %v472
    %vm476 = vcmask 259204
    %477 = vst.msk [vmem:[#allocation2 + $0x6] sm:$0x30] %vm476, %v472
    %v478 = vpack.c.bf16 %v469, %v469
    %v480 = vrot.slane %v478, 2
    %481 = vrot.lane.b32.xlu0 %v480, 64
    %v482 = vpop.permute.xlu0 %481
    %v484 = vsel %vm46, %v482, 0
    %486 = vmatprep.subr.bf16.mxu0 0
    %487 = vmatpush1.bf16.msra.mxu0 %v231
    %488 = vmatprep.subr.bf16.mxu0 0
    %489 = vmatpush1.bf16.msra.mxu0 %v232
    %490 = vmatprep.subr.bf16.mxu0 0
    %491 = vmatpush1.bf16.msra.mxu0 0
    %492 = vmatprep.subr.bf16.mxu0 0
    %493 = vmatpush1.bf16.msra.mxu0 0
    %494 = vmatprep.subr.bf16.mxu0 0
    %495 = vmatpush1.bf16.msra.mxu0 0
    %496 = vmatprep.subr.bf16.mxu0 0
    %497 = vmatpush1.bf16.msra.mxu0 0
    %498 = vmatprep.subr.bf16.mxu0 0
    %499 = vmatpush1.bf16.msra.mxu0 0
    %500 = vmatprep.subr.bf16.mxu0 0
    %501 = vmatpush1.bf16.msra.mxu0 0
    %502 = vmatprep.subr.bf16.mxu0 0
    %503 = vmatpush1.bf16.msra.mxu0 0
    %504 = vmatprep.subr.bf16.mxu0 0
    %505 = vmatpush1.bf16.msra.mxu0 0
    %506 = vmatprep.subr.bf16.mxu0 0
    %507 = vmatpush1.bf16.msra.mxu0 0
    %508 = vmatprep.subr.bf16.mxu0 0
    %509 = vmatpush1.bf16.msra.mxu0 0
    %510 = vmatprep.subr.bf16.mxu0 0
    %511 = vmatpush1.bf16.msra.mxu0 0
    %512 = vmatprep.subr.bf16.mxu0 0
    %513 = vmatpush1.bf16.msra.mxu0 0
    %514 = vmatprep.subr.bf16.mxu0 0
    %515 = vmatpush1.bf16.msra.mxu0 0
    %516 = vmatprep.subr.bf16.mxu0 0
    %517 = vmatpush1.bf16.msra.mxu0 0
    %518 = vmatprep.mubr.bf16.mxu0 0
    %519 = vmatmul.mubr.bf16.gmra.mrb[0].mxu0 %v484
    %v520 = vpop.f32.mrb[0].mxu0
    %v521 = vadd.f32 0.0, %v520
    %v522 = vpop.f32.mrb[0].mxu0
    %v523 = vpop.f32.mrb[0].mxu0
    %v524 = vpop.f32.mrb[0].mxu0
    %525 = vdwg.mxu0
    %v527 = vrot.slane %v521, 2
    %v529 = vadd.f32 %v213, %v527
    %v530 = vmul.f32 %v529, 0.5
    %v531 = vtanh.pop %v530
    %v532 = vmul.f32 %v531, 0.5
    %v533 = vadd.f32 %v532, 0.5
    %v534 = vtanh.pop %v529
    %v536 = vrot.slane %v463, 6
    %v538 = vmul.f32 %v533, %v536
    %540 = vrot.lane.b32.xlu0 %v534, 32
    %v541 = vpop.permute.xlu0 %540
    %v543 = vmul.f32 %v533, %v541
    %545 = vrot.lane.b32.xlu0 %v543, 32
    %v546 = vpop.permute.xlu0 %545
    %v548 = vadd.f32 %v538, %v546
    %v549 = vtanh.pop %v548
    %551 = vrot.lane.b32.xlu0 %v549, 32
    %v552 = vpop.permute.xlu0 %551
    %v554 = vmul.f32 %v533, %v552
    %556 = vrot.lane.b32.xlu0 %v554, 64
    %v557 = vpop.permute.xlu0 %556
    %vm559 = vcmask 130054
    %560 = vst.msk [vmem:[#allocation2] sm:$0xc0] %vm559, %v557
    %vm561 = vcmask 261254
    %562 = vst.msk [vmem:[#allocation2 + $0x2] sm:$0xc0] %vm561, %v557
    %v563 = vpack.c.bf16 %v554, %v554
    %v565 = vrot.slane %v563, 3
    %566 = vrot.lane.b32.xlu0 %v565, 64
    %v567 = vpop.permute.xlu0 %566
    %v569 = vsel %vm46, %v567, 0
    %571 = vmatprep.subr.bf16.mxu0 0
    %572 = vmatpush1.bf16.msra.mxu0 %v231
    %573 = vmatprep.subr.bf16.mxu0 0
    %574 = vmatpush1.bf16.msra.mxu0 %v232
    %575 = vmatprep.subr.bf16.mxu0 0
    %576 = vmatpush1.bf16.msra.mxu0 0
    %577 = vmatprep.subr.bf16.mxu0 0
    %578 = vmatpush1.bf16.msra.mxu0 0
    %579 = vmatprep.subr.bf16.mxu0 0
    %580 = vmatpush1.bf16.msra.mxu0 0
    %581 = vmatprep.subr.bf16.mxu0 0
    %582 = vmatpush1.bf16.msra.mxu0 0
    %583 = vmatprep.subr.bf16.mxu0 0
    %584 = vmatpush1.bf16.msra.mxu0 0
    %585 = vmatprep.subr.bf16.mxu0 0
    %586 = vmatpush1.bf16.msra.mxu0 0
    %587 = vmatprep.subr.bf16.mxu0 0
    %588 = vmatpush1.bf16.msra.mxu0 0
    %589 = vmatprep.subr.bf16.mxu0 0
    %590 = vmatpush1.bf16.msra.mxu0 0
    %591 = vmatprep.subr.bf16.mxu0 0
    %592 = vmatpush1.bf16.msra.mxu0 0
    %593 = vmatprep.subr.bf16.mxu0 0
    %594 = vmatpush1.bf16.msra.mxu0 0
    %595 = vmatprep.subr.bf16.mxu0 0
    %596 = vmatpush1.bf16.msra.mxu0 0
    %597 = vmatprep.subr.bf16.mxu0 0
    %598 = vmatpush1.bf16.msra.mxu0 0
    %599 = vmatprep.subr.bf16.mxu0 0
    %600 = vmatpush1.bf16.msra.mxu0 0
    %601 = vmatprep.subr.bf16.mxu0 0
    %602 = vmatpush1.bf16.msra.mxu0 0
    %603 = vmatprep.mubr.bf16.mxu0 0
    %604 = vmatmul.mubr.bf16.gmra.mrb[0].mxu0 %v569
    %v605 = vpop.f32.mrb[0].mxu0
    %v606 = vadd.f32 0.0, %v605
    %v607 = vpop.f32.mrb[0].mxu0
    %v608 = vpop.f32.mrb[0].mxu0
    %v609 = vpop.f32.mrb[0].mxu0
    %610 = vdwg.mxu0
    %v611 = vadd.f32 %v216, %v606
    %v612 = vmul.f32 %v611, 0.5
    %v613 = vtanh.pop %v612
    %v614 = vmul.f32 %v613, 0.5
    %v615 = vadd.f32 %v614, 0.5
    %v616 = vtanh.pop %v611
    %v618 = vrot.slane %v548, 6
    %v620 = vmul.f32 %v615, %v618
    %622 = vrot.lane.b32.xlu0 %v616, 32
    %v623 = vpop.permute.xlu0 %622
    %v625 = vmul.f32 %v615, %v623
    %627 = vrot.lane.b32.xlu0 %v625, 32
    %v628 = vpop.permute.xlu0 %627
    %v630 = vadd.f32 %v620, %v628
    %v631 = vtanh.pop %v630
    %633 = vrot.lane.b32.xlu0 %v631, 32
    %v634 = vpop.permute.xlu0 %633
    %v636 = vmul.f32 %v615, %v634
    %638 = vrot.lane.b32.xlu0 %v636, 64
    %v639 = vpop.permute.xlu0 %638
    %641 = vst.msk [vmem:[#allocation2 + $0x8] sm:$0x3] %vm305, %v639
    %642 = vst.msk [vmem:[#allocation2 + $0x6] sm:$0x3] %vm307, %v639
    %v643 = vpack.c.bf16 %v636, %v636
    %645 = vrot.lane.b32.xlu0 %v643, 64
    %v646 = vpop.permute.xlu0 %645
    %v648 = vsel %vm46, %v646, 0
    %650 = vmatprep.subr.bf16.mxu0 0
    %651 = vmatpush1.bf16.msra.mxu0 %v231
    %652 = vmatprep.subr.bf16.mxu0 0
    %653 = vmatpush1.bf16.msra.mxu0 %v232
    %654 = vmatprep.subr.bf16.mxu0 0
    %655 = vmatpush1.bf16.msra.mxu0 0
    %656 = vmatprep.subr.bf16.mxu0 0
    %657 = vmatpush1.bf16.msra.mxu0 0
    %658 = vmatprep.subr.bf16.mxu0 0
    %659 = vmatpush1.bf16.msra.mxu0 0
    %660 = vmatprep.subr.bf16.mxu0 0
    %661 = vmatpush1.bf16.msra.mxu0 0
    %662 = vmatprep.subr.bf16.mxu0 0
    %663 = vmatpush1.bf16.msra.mxu0 0
    %664 = vmatprep.subr.bf16.mxu0 0
    %665 = vmatpush1.bf16.msra.mxu0 0
    %666 = vmatprep.subr.bf16.mxu0 0
    %667 = vmatpush1.bf16.msra.mxu0 0
    %668 = vmatprep.subr.bf16.mxu0 0
    %669 = vmatpush1.bf16.msra.mxu0 0
    %670 = vmatprep.subr.bf16.mxu0 0
    %671 = vmatpush1.bf16.msra.mxu0 0
    %672 = vmatprep.subr.bf16.mxu0 0
    %673 = vmatpush1.bf16.msra.mxu0 0
    %674 = vmatprep.subr.bf16.mxu0 0
    %675 = vmatpush1.bf16.msra.mxu0 0
    %676 = vmatprep.subr.bf16.mxu0 0
    %677 = vmatpush1.bf16.msra.mxu0 0
    %678 = vmatprep.subr.bf16.mxu0 0
    %679 = vmatpush1.bf16.msra.mxu0 0
    %680 = vmatprep.subr.bf16.mxu0 0
    %681 = vmatpush1.bf16.msra.mxu0 0
    %682 = vmatprep.mubr.bf16.mxu0 0
    %683 = vmatmul.mubr.bf16.gmra.mrb[0].mxu0 %v648
    %v684 = vpop.f32.mrb[0].mxu0
    %v685 = vadd.f32 0.0, %v684
    %v686 = vpop.f32.mrb[0].mxu0
    %v687 = vpop.f32.mrb[0].mxu0
    %v688 = vpop.f32.mrb[0].mxu0
    %689 = vdwg.mxu0
    %v691 = vrot.slane %v685, 6
    %v693 = vadd.f32 %v216, %v691
    %v694 = vmul.f32 %v693, 0.5
    %v695 = vtanh.pop %v694
    %v696 = vmul.f32 %v695, 0.5
    %v697 = vadd.f32 %v696, 0.5
    %v698 = vtanh.pop %v693
    %v700 = vrot.slane %v630, 6
    %v702 = vmul.f32 %v697, %v700
    %704 = vrot.lane.b32.xlu0 %v698, 32
    %v705 = vpop.permute.xlu0 %704
    %v707 = vmul.f32 %v697, %v705
    %709 = vrot.lane.b32.xlu0 %v707, 32
    %v710 = vpop.permute.xlu0 %709
    %v712 = vadd.f32 %v702, %v710
    %v713 = vtanh.pop %v712
    %715 = vrot.lane.b32.xlu0 %v713, 32
    %v716 = vpop.permute.xlu0 %715
    %v718 = vmul.f32 %v697, %v716
    %720 = vrot.lane.b32.xlu0 %v718, 64
    %v721 = vpop.permute.xlu0 %720
    %723 = vst.msk [vmem:[#allocation2 + $0x8] sm:$0xc] %vm389, %v721
    %724 = vst.msk [vmem:[#allocation2 + $0x2] sm:$0xc] %vm391, %v721
    %v725 = vpack.c.bf16 %v718, %v718
    %v727 = vrot.slane %v725, 1
    %728 = vrot.lane.b32.xlu0 %v727, 64
    %v729 = vpop.permute.xlu0 %728
    %v731 = vsel %vm46, %v729, 0
    %733 = vmatprep.subr.bf16.mxu0 0
    %734 = vmatpush1.bf16.msra.mxu0 %v231
    %735 = vmatprep.subr.bf16.mxu0 0
    %736 = vmatpush1.bf16.msra.mxu0 %v232
    %737 = vmatprep.subr.bf16.mxu0 0
    %738 = vmatpush1.bf16.msra.mxu0 0
    %739 = vmatprep.subr.bf16.mxu0 0
    %740 = vmatpush1.bf16.msra.mxu0 0
    %741 = vmatprep.subr.bf16.mxu0 0
    %742 = vmatpush1.bf16.msra.mxu0 0
    %743 = vmatprep.subr.bf16.mxu0 0
    %744 = vmatpush1.bf16.msra.mxu0 0
    %745 = vmatprep.subr.bf16.mxu0 0
    %746 = vmatpush1.bf16.msra.mxu0 0
    %747 = vmatprep.subr.bf16.mxu0 0
    %748 = vmatpush1.bf16.msra.mxu0 0
    %749 = vmatprep.subr.bf16.mxu0 0
    %750 = vmatpush1.bf16.msra.mxu0 0
    %751 = vmatprep.subr.bf16.mxu0 0
    %752 = vmatpush1.bf16.msra.mxu0 0
    %753 = vmatprep.subr.bf16.mxu0 0
    %754 = vmatpush1.bf16.msra.mxu0 0
    %755 = vmatprep.subr.bf16.mxu0 0
    %756 = vmatpush1.bf16.msra.mxu0 0
    %757 = vmatprep.subr.bf16.mxu0 0
    %758 = vmatpush1.bf16.msra.mxu0 0
    %759 = vmatprep.subr.bf16.mxu0 0
    %760 = vmatpush1.bf16.msra.mxu0 0
    %761 = vmatprep.subr.bf16.mxu0 0
    %762 = vmatpush1.bf16.msra.mxu0 0
    %763 = vmatprep.subr.bf16.mxu0 0
    %764 = vmatpush1.bf16.msra.mxu0 0
    %765 = vmatprep.mubr.bf16.mxu0 0
    %766 = vmatmul.mubr.bf16.gmra.mrb[0].mxu0 %v731
    %v767 = vpop.f32.mrb[0].mxu0
    %v768 = vadd.f32 0.0, %v767
    %v769 = vpop.f32.mrb[0].mxu0
    %v770 = vpop.f32.mrb[0].mxu0
    %v771 = vpop.f32.mrb[0].mxu0
    %772 = vdwg.mxu0
    %v774 = vrot.slane %v768, 4
    %v776 = vadd.f32 %v216, %v774
    %v777 = vmul.f32 %v776, 0.5
    %v778 = vtanh.pop %v777
    %v779 = vmul.f32 %v778, 0.5
    %v780 = vadd.f32 %v779, 0.5
    %v781 = vtanh.pop %v776
    %v783 = vrot.slane %v712, 6
    %v785 = vmul.f32 %v780, %v783
    %787 = vrot.lane.b32.xlu0 %v781, 32
    %v788 = vpop.permute.xlu0 %787
    %v790 = vmul.f32 %v780, %v788
    %792 = vrot.lane.b32.xlu0 %v790, 32
    %v793 = vpop.permute.xlu0 %792
    %v795 = vadd.f32 %v785, %v793
    %v796 = vtanh.pop %v795
    %798 = vrot.lane.b32.xlu0 %v796, 32
    %v799 = vpop.permute.xlu0 %798
    %v801 = vmul.f32 %v780, %v799
    %803 = vrot.lane.b32.xlu0 %v801, 64
    %v804 = vpop.permute.xlu0 %803
    %806 = vst.msk [vmem:[#allocation2 + $0x8] sm:$0x30] %vm474, %v804
    %807 = vst.msk [vmem:[#allocation2 - $0x2] sm:$0x30] %vm476, %v804
    %v808 = vpack.c.bf16 %v801, %v801
    %v810 = vrot.slane %v808, 2
    %811 = vrot.lane.b32.xlu0 %v810, 64
    %v812 = vpop.permute.xlu0 %811
    %v814 = vsel %vm46, %v812, 0
    %816 = vmatprep.subr.bf16.mxu0 0
    %817 = vmatpush1.bf16.msra.mxu0 %v231
    %818 = vmatprep.subr.bf16.mxu0 0
    %819 = vmatpush1.bf16.msra.mxu0 %v232
    %820 = vmatprep.subr.bf16.mxu0 0
    %821 = vmatpush1.bf16.msra.mxu0 0
    %822 = vmatprep.subr.bf16.mxu0 0
    %823 = vmatpush1.bf16.msra.mxu0 0
    %824 = vmatprep.subr.bf16.mxu0 0
    %825 = vmatpush1.bf16.msra.mxu0 0
    %826 = vmatprep.subr.bf16.mxu0 0
    %827 = vmatpush1.bf16.msra.mxu0 0
    %828 = vmatprep.subr.bf16.mxu0 0
    %829 = vmatpush1.bf16.msra.mxu0 0
    %830 = vmatprep.subr.bf16.mxu0 0
    %831 = vmatpush1.bf16.msra.mxu0 0
    %832 = vmatprep.subr.bf16.mxu0 0
    %833 = vmatpush1.bf16.msra.mxu0 0
    %834 = vmatprep.subr.bf16.mxu0 0
    %835 = vmatpush1.bf16.msra.mxu0 0
    %836 = vmatprep.subr.bf16.mxu0 0
    %837 = vmatpush1.bf16.msra.mxu0 0
    %838 = vmatprep.subr.bf16.mxu0 0
    %839 = vmatpush1.bf16.msra.mxu0 0
    %840 = vmatprep.subr.bf16.mxu0 0
    %841 = vmatpush1.bf16.msra.mxu0 0
    %842 = vmatprep.subr.bf16.mxu0 0
    %843 = vmatpush1.bf16.msra.mxu0 0
    %844 = vmatprep.subr.bf16.mxu0 0
    %845 = vmatpush1.bf16.msra.mxu0 0
    %846 = vmatprep.subr.bf16.mxu0 0
    %847 = vmatpush1.bf16.msra.mxu0 0
    %848 = vmatprep.mubr.bf16.mxu0 0
    %849 = vmatmul.mubr.bf16.gmra.mrb[0].mxu0 %v814
    %v850 = vpop.f32.mrb[0].mxu0
    %v851 = vadd.f32 0.0, %v850
    %v852 = vpop.f32.mrb[0].mxu0
    %v853 = vpop.f32.mrb[0].mxu0
    %v854 = vpop.f32.mrb[0].mxu0
    %855 = vdwg.mxu0
    %v857 = vrot.slane %v851, 2
    %v859 = vadd.f32 %v216, %v857
    %v860 = vmul.f32 %v859, 0.5
    %v861 = vtanh.pop %v860
    %v862 = vmul.f32 %v861, 0.5
    %v863 = vadd.f32 %v862, 0.5
    %v864 = vtanh.pop %v859
    %v866 = vrot.slane %v795, 6
    %v868 = vmul.f32 %v863, %v866
    %870 = vrot.lane.b32.xlu0 %v864, 32
    %v871 = vpop.permute.xlu0 %870
    %v873 = vmul.f32 %v863, %v871
    %875 = vrot.lane.b32.xlu0 %v873, 32
    %v876 = vpop.permute.xlu0 %875
    %v878 = vadd.f32 %v868, %v876
    %v879 = vtanh.pop %v878
    %881 = vrot.lane.b32.xlu0 %v879, 32
    %v882 = vpop.permute.xlu0 %881
    %v884 = vmul.f32 %v863, %v882
    %886 = vrot.lane.b32.xlu0 %v884, 64
    %v887 = vpop.permute.xlu0 %886
    %889 = vst.msk [vmem:[#allocation2 + $0x8] sm:$0xc0] %vm559, %v887
    %890 = vst.msk [vmem:[#allocation2 - $0x6] sm:$0xc0] %vm561, %v887
    %v891 = vld [vmem:[#allocation2] sm:$0xff]
    %v892 = vld [vmem:[#allocation2 + $0x8] sm:$0xff]
    %v893 = vadd.f32 %v44, %v891
    %v894 = vadd.f32 %v45, %v892
    %v895 = vld [vmem:[%s7] sm:$0xff]
    %v896 = vld [vmem:[%s7 + $0x8] sm:$0xff]
    %v897 = vld [vmem:[%s7 + $0x10] sm:$0xff]
    %v898 = vld [vmem:[%s7 + $0x18] sm:$0xff]
    %v899 = vld [vmem:[%s8] sm:$0x1]
    %v901 = vlaneseq
    %v902 = vshrl.u32 %v901, 7
    %v903 = vsub.s32 0, %v902
    %v904 = vrot.slane %v899, %v903
    %v907 = vsel %vm46, %v893, 0
    %v910 = vsel %vm46, %v894, 0
    %912 = vmatprep.subr.mxu0 0.0
    %913 = vmatpush1.msra.mxu0 %v895
    %914 = vmatprep.subr.mxu0 0.0
    %915 = vmatpush1.msra.mxu0 %v896
    %916 = vmatprep.subr.mxu0 0.0
    %917 = vmatpush1.msra.mxu0 %v897
    %918 = vmatprep.subr.mxu0 0.0
    %919 = vmatpush1.msra.mxu0 %v898
    %920 = vmatprep.subr.mxu0 0.0
    %921 = vmatpush1.msra.mxu0 0.0
    %922 = vmatprep.subr.mxu0 0.0
    %923 = vmatpush1.msra.mxu0 0.0
    %924 = vmatprep.subr.mxu0 0.0
    %925 = vmatpush1.msra.mxu0 0.0
    %926 = vmatprep.subr.mxu0 0.0
    %927 = vmatpush1.msra.mxu0 0.0
    %928 = vmatprep.subr.mxu0 0.0
    %929 = vmatpush1.msra.mxu0 0.0
    %930 = vmatprep.subr.mxu0 0.0
    %931 = vmatpush1.msra.mxu0 0.0
    %932 = vmatprep.subr.mxu0 0.0
    %933 = vmatpush1.msra.mxu0 0.0
    %934 = vmatprep.subr.mxu0 0.0
    %935 = vmatpush1.msra.mxu0 0.0
    %936 = vmatprep.subr.mxu0 0.0
    %937 = vmatpush1.msra.mxu0 0.0
    %938 = vmatprep.subr.mxu0 0.0
    %939 = vmatpush1.msra.mxu0 0.0
    %940 = vmatprep.subr.mxu0 0.0
    %941 = vmatpush1.msra.mxu0 0.0
    %942 = vmatprep.subr.mxu0 0.0
    %943 = vmatpush1.msra.mxu0 0.0
    %944 = vmatprep.subr.mxu0 0.0
    %945 = vmatpush1.msra.mxu0 0.0
    %946 = vmatprep.subr.mxu0 0.0
    %947 = vmatpush1.msra.mxu0 0.0
    %948 = vmatprep.subr.mxu0 0.0
    %949 = vmatpush1.msra.mxu0 0.0
    %950 = vmatprep.subr.mxu0 0.0
    %951 = vmatpush1.msra.mxu0 0.0
    %952 = vmatprep.subr.mxu0 0.0
    %953 = vmatpush1.msra.mxu0 0.0
    %954 = vmatprep.subr.mxu0 0.0
    %955 = vmatpush1.msra.mxu0 0.0
    %956 = vmatprep.subr.mxu0 0.0
    %957 = vmatpush1.msra.mxu0 0.0
    %958 = vmatprep.subr.mxu0 0.0
    %959 = vmatpush1.msra.mxu0 0.0
    %960 = vmatprep.subr.mxu0 0.0
    %961 = vmatpush1.msra.mxu0 0.0
    %962 = vmatprep.subr.mxu0 0.0
    %963 = vmatpush1.msra.mxu0 0.0
    %964 = vmatprep.subr.mxu0 0.0
    %965 = vmatpush1.msra.mxu0 0.0
    %966 = vmatprep.subr.mxu0 0.0
    %967 = vmatpush1.msra.mxu0 0.0
    %968 = vmatprep.subr.mxu0 0.0
    %969 = vmatpush1.msra.mxu0 0.0
    %970 = vmatprep.subr.mxu0 0.0
    %971 = vmatpush1.msra.mxu0 0.0
    %972 = vmatprep.subr.mxu0 0.0
    %973 = vmatpush1.msra.mxu0 0.0
    %974 = vmatprep.subr.mxu0 0.0
    %975 = vmatpush1.msra.mxu0 0.0
    %976 = vmatprep.mubr.f32.mxu0 0.0
    %977 = vmatmul.mubr.f32.gmra.mrb[0].mxu0 %v907
    %v978 = vpop.f32.mrb[0].mxu0
    %v979 = vadd.f32 %v904, %v978
    %v980 = vpop.f32.mrb[0].mxu0
    %981 = vmatprep.mubr.f32.mxu0 0.0
    %982 = vmatmul.mubr.f32.gmra.mrb[0].mxu0 %v910
    %v983 = vpop.f32.mrb[0].mxu0
    %v984 = vadd.f32 %v904, %v983
    %v985 = vpop.f32.mrb[0].mxu0
    %986 = vdwg.mxu0
    %v987 = vmax.f32 %v979, 0.0
    %v988 = vmax.f32 %v984, 0.0
    %v989 = vld [vmem:[%s9] sm:$0xff]
    %v990 = vld [vmem:[%s9 + $0x8] sm:$0xff]
    %v991 = vld [vmem:[%s9 + $0x10] sm:$0xff]
    %v992 = vld [vmem:[%s9 + $0x18] sm:$0xff]
    %v993 = vld [vmem:[%s9 + $0x20] sm:$0xff]
    %v994 = vld [vmem:[%s9 + $0x28] sm:$0xff]
    %v995 = vld [vmem:[%s9 + $0x30] sm:$0xff]
    %v996 = vld [vmem:[%s9 + $0x38] sm:$0xff]
    %v997 = vld [vmem:[%s10] sm:$0x1]
    %v999 = vlaneseq
    %v1000 = vshrl.u32 %v999, 7
    %v1001 = vsub.s32 0, %v1000
    %v1002 = vrot.slane %v997, %v1001
    %v1005 = vsel %vm174, %v987, 0
    %v1008 = vsel %vm174, %v988, 0
    %1010 = vmatprep.subr.mxu0 0.0
    %1011 = vmatpush1.msra.mxu0 %v989
    %1012 = vmatprep.subr.mxu0 0.0
    %1013 = vmatpush1.msra.mxu0 %v990
    %1014 = vmatprep.subr.mxu0 0.0
    %1015 = vmatpush1.msra.mxu0 %v991
    %1016 = vmatprep.subr.mxu0 0.0
    %1017 = vmatpush1.msra.mxu0 %v992
    %1018 = vmatprep.subr.mxu0 0.0
    %1019 = vmatpush1.msra.mxu0 %v993
    %1020 = vmatprep.subr.mxu0 0.0
    %1021 = vmatpush1.msra.mxu0 %v994
    %1022 = vmatprep.subr.mxu0 0.0
    %1023 = vmatpush1.msra.mxu0 %v995
    %1024 = vmatprep.subr.mxu0 0.0
    %1025 = vmatpush1.msra.mxu0 %v996
    %1026 = vmatprep.subr.mxu0 0.0
    %1027 = vmatpush1.msra.mxu0 0.0
    %1028 = vmatprep.subr.mxu0 0.0
    %1029 = vmatpush1.msra.mxu0 0.0
    %1030 = vmatprep.subr.mxu0 0.0
    %1031 = vmatpush1.msra.mxu0 0.0
    %1032 = vmatprep.subr.mxu0 0.0
    %1033 = vmatpush1.msra.mxu0 0.0
    %1034 = vmatprep.subr.mxu0 0.0
    %1035 = vmatpush1.msra.mxu0 0.0
    %1036 = vmatprep.subr.mxu0 0.0
    %1037 = vmatpush1.msra.mxu0 0.0
    %1038 = vmatprep.subr.mxu0 0.0
    %1039 = vmatpush1.msra.mxu0 0.0
    %1040 = vmatprep.subr.mxu0 0.0
    %1041 = vmatpush1.msra.mxu0 0.0
    %1042 = vmatprep.subr.mxu0 0.0
    %1043 = vmatpush1.msra.mxu0 0.0
    %1044 = vmatprep.subr.mxu0 0.0
    %1045 = vmatpush1.msra.mxu0 0.0
    %1046 = vmatprep.subr.mxu0 0.0
    %1047 = vmatpush1.msra.mxu0 0.0
    %1048 = vmatprep.subr.mxu0 0.0
    %1049 = vmatpush1.msra.mxu0 0.0
    %1050 = vmatprep.subr.mxu0 0.0
    %1051 = vmatpush1.msra.mxu0 0.0
    %1052 = vmatprep.subr.mxu0 0.0
    %1053 = vmatpush1.msra.mxu0 0.0
    %1054 = vmatprep.subr.mxu0 0.0
    %1055 = vmatpush1.msra.mxu0 0.0
    %1056 = vmatprep.subr.mxu0 0.0
    %1057 = vmatpush1.msra.mxu0 0.0
    %1058 = vmatprep.subr.mxu0 0.0
    %1059 = vmatpush1.msra.mxu0 0.0
    %1060 = vmatprep.subr.mxu0 0.0
    %1061 = vmatpush1.msra.mxu0 0.0
    %1062 = vmatprep.subr.mxu0 0.0
    %1063 = vmatpush1.msra.mxu0 0.0
    %1064 = vmatprep.subr.mxu0 0.0
    %1065 = vmatpush1.msra.mxu0 0.0
    %1066 = vmatprep.subr.mxu0 0.0
    %1067 = vmatpush1.msra.mxu0 0.0
    %1068 = vmatprep.subr.mxu0 0.0
    %1069 = vmatpush1.msra.mxu0 0.0
    %1070 = vmatprep.subr.mxu0 0.0
    %1071 = vmatpush1.msra.mxu0 0.0
    %1072 = vmatprep.subr.mxu0 0.0
    %1073 = vmatpush1.msra.mxu0 0.0
    %1074 = vmatprep.mubr.f32.mxu0 0.0
    %1075 = vmatmul.mubr.f32.gmra.mrb[0].mxu0 %v1005
    %v1076 = vpop.f32.mrb[0].mxu0
    %v1077 = vadd.f32 %v1002, %v1076
    %v1078 = vpop.f32.mrb[0].mxu0
    %1079 = vmatprep.mubr.f32.mxu0 0.0
    %1080 = vmatmul.mubr.f32.gmra.mrb[0].mxu0 %v1008
    %v1081 = vpop.f32.mrb[0].mxu0
    %v1082 = vadd.f32 %v1002, %v1081
    %v1083 = vpop.f32.mrb[0].mxu0
    %1084 = vdwg.mxu0
    %v1085 = vadd.f32 %v893, %v1077
    %v1086 = vadd.f32 %v894, %v1082
    %1087 = vst.msk [vmem:[#allocation3] sm:$0xff] %vm46, %v1085
    %1088 = vst.msk [vmem:[#allocation3 + $0x8] sm:$0xff] %vm46, %v1086
    %1089 = vst.msk [vmem:[#allocation5 - $0x6] sm:$0xc0] %vm559, %v887
    %1090 = vrot.lane.b32.xlu0 %v884, 48
    %v1091 = vpop.permute.xlu0 %1090
    %1093 = vst.msk [vmem:[#allocation5 - $0x4] sm:$0xc0] %vm559, %v1091
    %1095 = vrot.lane.b32.xlu0 %v878, 96
    %v1096 = vpop.permute.xlu0 %1095
    %1098 = vst.msk [vmem:[#allocation7 - $0x6] sm:$0xc0] %vm559, %v1096
    %1099 = vrot.lane.b32.xlu0 %v878, 80
    %v1100 = vpop.permute.xlu0 %1099
    %1102 = vst.msk [vmem:[#allocation7 - $0x4] sm:$0xc0] %vm559, %v1100
    // Predicated region
    $region46: #{encoder_layer_forward.1} parent=1 // pred_check
      _
    $region47: #{encoder_layer_forward.1} parent=1 // pred_check_branch
      %1104 = sbr.rel (0) target = $region49
    $region48: #{encoder_layer_forward.1} parent=1 // pred_region
      %s1106 = ssub.s32 256, 256
      %1107 = vsyncadd [#allocation4], %s1106
      %s1108 = sshll.u32 [#allocation3], 4
      %s1109 = int_to_ptr.vmem [resolvable:$true] %s1108
      %1114 = dma.vmem_to_hbm [thread:$0]  %s1109, 256, %s11, [#allocation4], 128, 128, 8
    $region49: #{encoder_layer_forward.1} parent=1 // pred_fallthru
      _
    // Predicated region
    $region50: #{encoder_layer_forward.1} parent=1 // pred_check
      _
    $region51: #{encoder_layer_forward.1} parent=1 // pred_check_branch
      %1116 = sbr.rel (0) target = $region53
    $region52: #{encoder_layer_forward.1} parent=1 // pred_region
      %s1118 = ssub.s32 64, 64
      %1119 = vsyncadd [#allocation6], %s1118
      %s1121 = sshll.u32 [#allocation5], 4
      %s1122 = int_to_ptr.vmem [resolvable:$true] %s1121
      %1124 = dma.vmem_to_hbm [thread:$0]  %s1122, 64, %s12, [#allocation6]
    $region53: #{encoder_layer_forward.1} parent=1 // pred_fallthru
      _
    // Predicated region
    $region54: #{encoder_layer_forward.1} parent=1 // pred_check
      _
    $region55: #{encoder_layer_forward.1} parent=1 // pred_check_branch
      %1126 = sbr.rel (0) target = $region57
    $region56: #{encoder_layer_forward.1} parent=1 // pred_region
      %s1128 = ssub.s32 64, 64
      %1129 = vsyncadd [#allocation6], %s1128
      %s1131 = sshll.u32 [#allocation7], 4
      %s1132 = int_to_ptr.vmem [resolvable:$true] %s1131
      %1134 = dma.vmem_to_hbm [thread:$0]  %s1132, 64, %s13, [#allocation6]
    $region57: #{encoder_layer_forward.1} parent=1 // pred_fallthru
      _
    // Predicated region
    $region58: #{encoder_layer_forward.1} parent=1 // pred_check
      _
    $region59: #{encoder_layer_forward.1} parent=1 // pred_check_branch
      %1136 = sbr.rel (0) target = $region61
    $region60: #{encoder_layer_forward.1} parent=1 // pred_region
      %1137 = dma.done [#allocation4], 256
    $region61: #{encoder_layer_forward.1} parent=1 // pred_fallthru
      _
    // Predicated region
    $region62: #{encoder_layer_forward.1} parent=1 // pred_check
      _
    $region63: #{encoder_layer_forward.1} parent=1 // pred_check_branch
      %1139 = sbr.rel (0) target = $region65
    $region64: #{encoder_layer_forward.1} parent=1 // pred_region
      %1140 = dma.done [#allocation6], 64
    $region65: #{encoder_layer_forward.1} parent=1 // pred_fallthru
      _
    // Predicated region
    $region66: #{encoder_layer_forward.1} parent=1 // pred_check
      _
    $region67: #{encoder_layer_forward.1} parent=1 // pred_check_branch
      %1142 = sbr.rel (0) target = $region69
    $region68: #{encoder_layer_forward.1} parent=1 // pred_region
      %1143 = dma.done [#allocation6], 64
    $region69: #{encoder_layer_forward.1} parent=1 // pred_fallthru
      _
    %1144 = vsyncpa [#allocation4], 1
    %1145 = vsyncpa [#allocation6], 1

</llo_original>
